<compile_context>
chip_gen: v7x
topology: tpu7x:2x2x1
jax: 0.10.0
libtpu: 0.0.40
codegen_flags: <defaults>
</compile_context>

<pallas_src>
import math

import jax
import jax.numpy as jnp
from jax import lax
from jax.experimental import pallas as pl
from jax.experimental.pallas import tpu as pltpu

_NEG_SLOPE = 0.01  # PyTorch LeakyReLU / F.leaky_relu default


def _leaky_relu(v):
    return jnp.where(v >= 0, v, _NEG_SLOPE * v)


def _gat_kernel(x_ref, qkw_ref, w_ref, out_ref, a_ref):
    # x_ref  : (1, F, N) bf16     qkw_ref : (F, 2*ATT) bf16   w_ref : (F, O) bf16
    # out_ref: (1, O, N) f32      a_ref   : (1, N, N)  (bf16 by default)
    x = x_ref[0]            # (F, N)   bf16
    qkw = qkw_ref[...]      # (F, 2*ATT) bf16
    w = w_ref[...]          # (F, O)   bf16
    att = qkw.shape[1] // 2

    # [Q^T ; K^T] = leaky_relu([queue|key]^T @ x) -> (2*ATT, N).
    # Single MXU pass; N stays the lane dim.
    qk_t = lax.dot_general(qkw, x, (((0,), (0,)), ((), ())),
                           preferred_element_type=jnp.float32)
    qk_t = _leaky_relu(qk_t)
    qt = qk_t[:att].astype(jnp.bfloat16)      # (ATT, N)
    kt = qk_t[att:].astype(jnp.bfloat16)      # (ATT, N)

    # S^T[m, n] = sum_a K[m, a] * Q[n, a]  -> (N, N) f32.
    # Keeping the transposed adjacency makes the final GCN matmul canonical.
    s_t = lax.dot_general(kt, qt, (((0,), (0,)), ((), ())),
                          preferred_element_type=jnp.float32)

    # softmax over PyTorch dim=1 (row index n of A[n, m]) == lane axis of S^T.
    s_max = jnp.max(s_t, axis=1, keepdims=True)
    e = jnp.exp(s_t - s_max)
    denom = jnp.sum(e, axis=1, keepdims=True)
    a_t = e * pl.reciprocal(denom, approx=True)          # (N, N) == A^T, f32

    # Writeback of A: the only explicit transpose in the kernel (off the MXU
    # critical path); f32 transpose, then cast to the (bf16) output dtype.
    a_ref[0] = jnp.transpose(a_t, (1, 0)).astype(a_ref.dtype)

    # GCN reordered:  out = leaky_relu(W^T @ x @ A^T), all lane-dense in N.
    z = lax.dot_general(w, x, (((0,), (0,)), ((), ())),
                        preferred_element_type=jnp.float32)        # (O, N)
    out = lax.dot_general(z.astype(jnp.bfloat16), a_t.astype(jnp.bfloat16),
                          (((1,), (0,)), ((), ())),
                          preferred_element_type=jnp.float32)      # (O, N)
    out_ref[0] = _leaky_relu(out).astype(out_ref.dtype)


def _vmem_limit_bytes():
    # Per-generation VMEM cap with ~16 MiB headroom for compiler scratch:
    # ~112 MiB on v5e/v6e (128 MiB physical), ~48 MiB on v7x (64 MiB physical).
    try:
        cap = int(pltpu.get_tpu_info().vmem_capacity_bytes)
    except Exception:
        cap = 64 * 1024 * 1024
    return max(32 * 1024 * 1024, cap - 16 * 1024 * 1024)


def gat_forward(x4, queue, key_w, weight, *, a_dtype=jnp.bfloat16):
    """x4: (B, F, H, W), queue/key_w: (F, ATT), weight: (F, O).

    Returns (out, A) with out: (B, O, H*W) in x4's dtype and A: (B, H*W, H*W)
    in `a_dtype` (bf16 by default to halve the dominant N^2 HBM writeback;
    pass jnp.float32 for the bit-faithful original dtype).
    """
    B, F, H, W = x4.shape
    N = H * W
    Fq, ATT = queue.shape
    Fw, O = weight.shape
    assert Fq == F and Fw == F and key_w.shape == (F, ATT)
    assert ATT % 8 == 0, "ATT must be a multiple of 8 for the static Q/K split"

    out_dtype = x4.dtype

    # bf16 MXU operands (halves HBM/DMA bytes); accumulation stays f32 in-kernel.
    x = x4.reshape(B, F, N).astype(jnp.bfloat16)                 # torch .view
    qk_w = jnp.concatenate([queue, key_w], axis=1).astype(jnp.bfloat16)  # (F, 2*ATT)
    w = weight.astype(jnp.bfloat16)

    out_shapes = (
        jax.ShapeDtypeStruct((B, O, N), out_dtype),              # output
        jax.ShapeDtypeStruct((B, N, N), a_dtype),                # adjacency A
    )

    return pl.pallas_call(
        _gat_kernel,
        out_shape=out_shapes,
        grid_spec=pltpu.PrefetchScalarGridSpec(
            num_scalar_prefetch=0,
            grid=(B,),
            in_specs=[
                pl.BlockSpec((1, F, N), lambda b: (b, 0, 0)),     # x per-batch
                pl.BlockSpec((F, 2 * ATT), lambda b: (0, 0)),     # [queue|key] resident
                pl.BlockSpec((F, O), lambda b: (0, 0)),           # weight resident
            ],
            out_specs=[
                pl.BlockSpec((1, O, N), lambda b: (b, 0, 0)),     # out
                pl.BlockSpec((1, N, N), lambda b: (b, 0, 0)),     # A
            ],
        ),
        compiler_params=pltpu.CompilerParams(
            dimension_semantics=("parallel",),                    # megacore over batch
            vmem_limit_bytes=_vmem_limit_bytes(),
        ),
    )(x, qk_w, w)


def kaiming_uniform(key, d0, d1, dtype=jnp.float32):
    # nn.init.kaiming_uniform_ (a=0): fan_in of a 2D (d0, d1) param is d1.
    bound = math.sqrt(6.0 / d1)
    return jax.random.uniform(key, (d0, d1), dtype=dtype, minval=-bound, maxval=bound)


def gat_reference(x4, queue, key_w, weight):
    """Plain-JAX f32 reference mirroring the PyTorch forward."""
    B, F, H, W = x4.shape
    hi = jax.lax.Precision.HIGHEST
    nf = x4.reshape(B, F, H * W)                       # (B, F, N)
    xt = jnp.transpose(nf, (0, 2, 1))                  # (B, N, F)
    q = _leaky_relu(jnp.einsum("bnf,fa->bna", xt, queue, precision=hi))
    k = _leaky_relu(jnp.einsum("bnf,fa->bna", xt, key_w, precision=hi))
    s = jnp.einsum("bna,bma->bnm", q, k, precision=hi)
    a = jax.nn.softmax(s, axis=1)                      # softmax over dim=1
    y = jnp.einsum("bnm,bfm->bnf", a, nf, precision=hi)
    y = jnp.einsum("bnf,fo->bno", y, weight, precision=hi)
    out = _leaky_relu(jnp.transpose(y, (0, 2, 1)))     # (B, O, N)
    return out, a


if __name__ == "__main__":
    # Small shapes consistent with the module structure: x -> view(B, F, H*W).
    B, F, H, W = 2, 256, 16, 16     # node_size N = 256 (same N as the module)
    ATT, O = 128, 128               # attention_size, output_size
    N = H * W

    root = jax.random.PRNGKey(0)
    kx, kq, kk, kw = jax.random.split(root, 4)

    x = 0.1 * jax.random.normal(kx, (B, F, H, W), dtype=jnp.float32)
    queue = kaiming_uniform(kq, F, ATT)
    key_w = kaiming_uniform(kk, F, ATT)
    weight = kaiming_uniform(kw, F, O)

    out, A = gat_forward(x, queue, key_w, weight)
    out = jax.block_until_ready(out)
    A = jax.block_until_ready(A)

    out_ref, A_ref = gat_reference(x, queue, key_w, weight)

    assert out.shape == (B, O, N)
    assert A.shape == (B, N, N)
    # bf16 MXU operands + bf16 A storage + approx reciprocal => slightly looser
    # tolerances than the f32 path (accumulation is still f32 everywhere).
    assert jnp.allclose(A.astype(jnp.float32), A_ref, atol=2e-3, rtol=2e-2)
    assert jnp.allclose(out, out_ref, atol=5e-3, rtol=2e-2)

    print("KERNEL_OK")
</pallas_src>

<mosaic_0001>
module attributes {stable_mosaic.version = 11 : i64} {
  func.func @_gat_kernel(%arg0: i32, %arg1: memref<1x256x256xbf16, #tpu.memory_space<vmem>>, %arg2: memref<256x256xbf16, #tpu.memory_space<vmem>>, %arg3: memref<256x128xbf16, #tpu.memory_space<vmem>>, %arg4: memref<1x128x256xf32, #tpu.memory_space<vmem>>, %arg5: memref<1x256x256xbf16, #tpu.memory_space<vmem>>) attributes {dimension_semantics = [#tpu.dimension_semantics<parallel>], iteration_bounds = array<i64: 2>, scalar_prefetch = 0 : i64, scratch_operands = 0 : i64, tpu.core_type = #tpu.core_type<tc>, window_params = [{transform_indices = @transform_0, window_bounds = array<i64: 1, 256, 256>}, {pipeline_mode = #tpu.pipeline_mode<synchronous>, transform_indices = @transform_1, window_bounds = array<i64: 256, 256>}, {pipeline_mode = #tpu.pipeline_mode<synchronous>, transform_indices = @transform_2, window_bounds = array<i64: 256, 128>}, {transform_indices = @transform_3, window_bounds = array<i64: 1, 128, 256>}, {transform_indices = @transform_4, window_bounds = array<i64: 1, 256, 256>}]} {
    %c0 = arith.constant 0 : index
    %c0_0 = arith.constant 0 : index
    %c0_1 = arith.constant 0 : index
    %0 = vector.load %arg1[%c0, %c0_0, %c0_1] : memref<1x256x256xbf16, #tpu.memory_space<vmem>>, vector<1x256x256xbf16>
    %1 = vector.shape_cast %0 : vector<1x256x256xbf16> to vector<256x256xbf16>
    %c0_2 = arith.constant 0 : index
    %c0_3 = arith.constant 0 : index
    %2 = vector.load %arg2[%c0_2, %c0_3] : memref<256x256xbf16, #tpu.memory_space<vmem>>, vector<256x256xbf16>
    %c0_4 = arith.constant 0 : index
    %c0_5 = arith.constant 0 : index
    %3 = vector.load %arg3[%c0_4, %c0_5] : memref<256x128xbf16, #tpu.memory_space<vmem>>, vector<256x128xbf16>
    %cst = arith.constant dense<0.000000e+00> : vector<256x256xf32>
    %4 = tpu.matmul %2, %1, %cst {dimension_numbers = #tpu.dot_dimension_numbers<[0], [0], [1], [1], [0, 1, 1, 1], [], []>} : vector<256x256xbf16>, vector<256x256xbf16>, vector<256x256xf32> -> vector<256x256xf32>
    %cst_6 = arith.constant 0.000000e+00 : f32
    %5 = vector.broadcast %cst_6 : f32 to vector<256x256xf32>
    %6 = arith.cmpf oge, %4, %5 : vector<256x256xf32>
    %cst_7 = arith.constant 0.00999999977 : f32
    %7 = vector.broadcast %cst_7 : f32 to vector<256x256xf32>
    %8 = arith.mulf %7, %4 : vector<256x256xf32>
    %9 = arith.select %6, %4, %8 : vector<256x256xi1>, vector<256x256xf32>
    %10 = vector.extract_strided_slice %9 {offsets = [0, 0], sizes = [128, 256], strides = [1, 1]} : vector<256x256xf32> to vector<128x256xf32>
    %11 = arith.truncf %10 : vector<128x256xf32> to vector<128x256xbf16>
    %12 = vector.extract_strided_slice %9 {offsets = [128, 0], sizes = [128, 256], strides = [1, 1]} : vector<256x256xf32> to vector<128x256xf32>
    %13 = arith.truncf %12 : vector<128x256xf32> to vector<128x256xbf16>
    %cst_8 = arith.constant dense<0.000000e+00> : vector<256x256xf32>
    %14 = tpu.matmul %13, %11, %cst_8 {dimension_numbers = #tpu.dot_dimension_numbers<[0], [0], [1], [1], [0, 1, 1, 1], [], []>} : vector<128x256xbf16>, vector<128x256xbf16>, vector<256x256xf32> -> vector<256x256xf32>
    %cst_9 = arith.constant dense<0xFF800000> : vector<256xf32>
    %15 = vector.multi_reduction <maximumf>, %14, %cst_9 [1] : vector<256x256xf32> to vector<256xf32>
    %16 = vector.shape_cast %15 : vector<256xf32> to vector<256x1xf32>
    %17 = vector.broadcast %16 : vector<256x1xf32> to vector<256x256xf32>
    %18 = arith.subf %14, %17 : vector<256x256xf32>
    %19 = math.exp %18 : vector<256x256xf32>
    %cst_10 = arith.constant dense<0.000000e+00> : vector<256xf32>
    %20 = vector.multi_reduction <add>, %19, %cst_10 [1] : vector<256x256xf32> to vector<256xf32>
    %21 = vector.shape_cast %20 : vector<256xf32> to vector<256x1xf32>
    %22 = tpu.reciprocal %21 {approx = true} : vector<256x1xf32> -> vector<256x1xf32>
    %23 = vector.broadcast %22 : vector<256x1xf32> to vector<256x256xf32>
    %24 = arith.mulf %19, %23 : vector<256x256xf32>
    %25 = tpu.transpose %24, [1, 0] : vector<256x256xf32> -> vector<256x256xf32>
    %26 = arith.truncf %25 : vector<256x256xf32> to vector<256x256xbf16>
    %c0_11 = arith.constant 0 : index
    %c0_12 = arith.constant 0 : index
    %c0_13 = arith.constant 0 : index
    %27 = vector.load %arg5[%c0_11, %c0_12, %c0_13] : memref<1x256x256xbf16, #tpu.memory_space<vmem>>, vector<1x256x256xbf16>
    %28 = vector.shape_cast %27 : vector<1x256x256xbf16> to vector<256x256xbf16>
    %29 = vector.shape_cast %26 : vector<256x256xbf16> to vector<1x256x256xbf16>
    tpu.vector_store %arg5[%c0_11, %c0_12, %c0_13], %29 {strides = array<i32>} : memref<1x256x256xbf16, #tpu.memory_space<vmem>>, vector<1x256x256xbf16>,
    %cst_14 = arith.constant dense<0.000000e+00> : vector<128x256xf32>
    %30 = tpu.matmul %3, %1, %cst_14 {dimension_numbers = #tpu.dot_dimension_numbers<[0], [0], [1], [1], [0, 1, 1, 1], [], []>} : vector<256x128xbf16>, vector<256x256xbf16>, vector<128x256xf32> -> vector<128x256xf32>
    %31 = arith.truncf %30 : vector<128x256xf32> to vector<128x256xbf16>
    %32 = arith.truncf %24 : vector<256x256xf32> to vector<256x256xbf16>
    %cst_15 = arith.constant dense<0.000000e+00> : vector<128x256xf32>
    %33 = tpu.matmul %31, %32, %cst_15 {dimension_numbers = #tpu.dot_dimension_numbers<[1], [0], [0], [1], [0, 0, 1, 1], [], []>} : vector<128x256xbf16>, vector<256x256xbf16>, vector<128x256xf32> -> vector<128x256xf32>
    %cst_16 = arith.constant 0.000000e+00 : f32
    %34 = vector.broadcast %cst_16 : f32 to vector<128x256xf32>
    %35 = arith.cmpf oge, %33, %34 : vector<128x256xf32>
    %cst_17 = arith.constant 0.00999999977 : f32
    %36 = vector.broadcast %cst_17 : f32 to vector<128x256xf32>
    %37 = arith.mulf %36, %33 : vector<128x256xf32>
    %38 = arith.select %35, %33, %37 : vector<128x256xi1>, vector<128x256xf32>
    %c0_18 = arith.constant 0 : index
    %c0_19 = arith.constant 0 : index
    %c0_20 = arith.constant 0 : index
    %39 = vector.load %arg4[%c0_18, %c0_19, %c0_20] : memref<1x128x256xf32, #tpu.memory_space<vmem>>, vector<1x128x256xf32>
    %40 = vector.shape_cast %39 : vector<1x128x256xf32> to vector<128x256xf32>
    %41 = vector.shape_cast %38 : vector<128x256xf32> to vector<1x128x256xf32>
    tpu.vector_store %arg4[%c0_18, %c0_19, %c0_20], %41 {strides = array<i32>} : memref<1x128x256xf32, #tpu.memory_space<vmem>>, vector<1x128x256xf32>,
    return
  }
  func.func @transform_0(%arg0: i32) -> (i32, i32, i32) {
    %c0_i32 = arith.constant 0 : i32
    %c0_i32_0 = arith.constant 0 : i32
    %c0_i32_1 = arith.constant 0 : i32
    return %arg0, %c0_i32, %c0_i32_0 : i32, i32, i32
  }
  func.func @transform_1(%arg0: i32) -> (i32, i32) {
    %c0_i32 = arith.constant 0 : i32
    %c0_i32_0 = arith.constant 0 : i32
    %c0_i32_1 = arith.constant 0 : i32
    return %c0_i32, %c0_i32_0 : i32, i32
  }
  func.func @transform_2(%arg0: i32) -> (i32, i32) {
    %c0_i32 = arith.constant 0 : i32
    %c0_i32_0 = arith.constant 0 : i32
    %c0_i32_1 = arith.constant 0 : i32
    return %c0_i32, %c0_i32_0 : i32, i32
  }
  func.func @transform_3(%arg0: i32) -> (i32, i32, i32) {
    %c0_i32 = arith.constant 0 : i32
    %c0_i32_0 = arith.constant 0 : i32
    %c0_i32_1 = arith.constant 0 : i32
    return %arg0, %c0_i32, %c0_i32_0 : i32, i32, i32
  }
  func.func @transform_4(%arg0: i32) -> (i32, i32, i32) {
    %c0_i32 = arith.constant 0 : i32
    %c0_i32_0 = arith.constant 0 : i32
    %c0_i32_1 = arith.constant 0 : i32
    return %arg0, %c0_i32, %c0_i32_0 : i32, i32, i32
  }
}

</mosaic_0001>

<llo_original>
// kernel: tpu_custom_call.1
$region0: #{tpu_custom_call.1}
  #allocation0 [shape = 'u32[]', space=smem, size = 0x4, offset = 0x4, fixed_abs, tag = 'smem constant byte address 0x4 - core index']
  #allocation1 [shape = 'u32[144,128]{1,0:T(1,128)}', space=vmem, size = 0x12000, scoped, tag = 'internal scratch']
  %s0 = inlined_call_operand.hbm [shape: bf16[2,256,256], index: 0, kind: input, shape index: {}]
  %s1 = inlined_call_operand.hbm [shape: bf16[256,256], index: 1, kind: input, shape index: {}]
  %s2 = inlined_call_operand.hbm [shape: bf16[256,128], index: 2, kind: input, shape index: {}]
  %s3 = inlined_call_operand.hbm [shape: f32[2,128,256], index: 3, kind: output, shape index: {0}]
  %s4 = inlined_call_operand.hbm [shape: bf16[2,256,256], index: 4, kind: output, shape index: {1}]
  %5 = xla_tuple %s3, %s4
  %s6 = sld [smem:[#allocation0]]
  $region65: #{tpu_custom_call.1} parent=0
    _
  %s8 = ssub.s32 1, %s6
  %s9 = scalar_select 0, %s8, %s6
  $region1: #{tpu_custom_call.1} parent=0
    #allocation2 [shape = 'u8[262144]{0}', space=vmem, size = 0x40000, scoped, tag = 'input window, operand 0']
    #allocation3 [shape = 's32[2]{0}', space=sflag, size = 0x8, scoped, tag = 'scoped memory for tpu_custom_call.1']
    #allocation4 [shape = 's32[2]{0}', space=sflag, size = 0x8, scoped, tag = 'scoped memory for tpu_custom_call.1']
    #allocation5 [shape = 'u8[131072]{0}', space=vmem, size = 0x20000, scoped, tag = 'input window, operand 1, single buffered']
    #allocation6 [shape = 's32[1]{0}', space=sflag, size = 0x4, scoped, tag = 'scoped memory for tpu_custom_call.1']
    #allocation7 [shape = 'u8[65536]{0}', space=vmem, size = 0x10000, scoped, tag = 'input window, operand 2, single buffered']
    #allocation8 [shape = 'u8[262144]{0}', space=vmem, size = 0x40000, scoped, tag = 'output window, operand 0']
    #allocation9 [shape = 'u8[262144]{0}', space=vmem, size = 0x40000, scoped, tag = 'output window, operand 1']
    #allocation10 [shape = 's32[2]{0}', space=sflag, size = 0x8, scoped, tag = 'scoped memory for tpu_custom_call.1']
    %10 = vsyncpa [#allocation3], 0
    %s11 = scalar_lea.sflag [#allocation3], 1
    %12 = vsyncpa %s11, 0
    %13 = vsyncpa [#allocation6], 0
    %14 = vsyncpa [#allocation4], 0
    %s15 = scalar_lea.sflag [#allocation4], 1
    %16 = vsyncpa %s15, 0
    %17 = vsyncpa [#allocation10], 0
    %s18 = scalar_lea.sflag [#allocation10], 1
    %19 = vsyncpa %s18, 0
    loop: start=0, step=1, limit=4
    $region2: #{tpu_custom_call.1} parent=1 // loop_pre_header
      _
    $region3: #{tpu_custom_call.1} parent=1 // loop_header
      %s21 = sphi 0, %s25
      %p22 = scmp.ge.s32.totalorder %s21, 4
      %s31 = sphi 0, %s33
      %s34 = sphi 0, %s31
      %s35 = sphi 0, %s34
      %s51 = sphi 0, %s35
      %s55 = sphi 0, %s55
      %s57 = sphi 0, %s55
      %s58 = sphi 0, %s57
      %s72 = sphi 0, %s58
      %s76 = sphi 0, %s76
      %s78 = sphi 0, %s76
      %s79 = sphi 0, %s78
      %s93 = sphi 0, %s79
      %s99 = sphi 0, %s101
      %s102 = sphi 0, %s99
      %s103 = sphi 0, %s102
      %s119 = sphi 0, %s103
      %s125 = sphi 0, %s127
      %s128 = sphi 0, %s125
      %s129 = sphi 0, %s128
      %s145 = sphi 0, %s129
    $region4: #{tpu_custom_call.1} parent=1 // loop_header_branch
      %24 = sbr.rel (%p22) target = $region8
    $region5: #{tpu_custom_call.1} parent=1 // loop_body
      %s26 = ssub.s32 %s21, 1
      %s27 = ssub.s32 %s21, 2
      %s28 = sadd.s32 %s21, 1
      %s29 = ssub.s32 %s21, %s28
      %p30 = scmp.eq.s32.totalorder %s29, 0
      %s32 = sadd.s32 %s31, 1
      %s33 = scalar_select %p30, %s31, %s32
      %p36 = pneg %p30
      %p37 = scmp.eq.s32.totalorder %s21, 1
      %p38 = por %p36, %p37
      %p39 = scmp.ne.s32.totalorder %s31, %s34
      %p40 = scmp.eq.s32.totalorder %s21, 0
      %p41 = por %p39, %p40
      %p42 = scmp.ne.s32.totalorder %s31, %s34
      %p43 = scmp.eq.s32.totalorder %s26, 1
      %p44 = por %p42, %p43
      %p45 = scmp.ne.s32.totalorder %s34, %s35
      %p46 = scmp.eq.s32.totalorder %s26, 0
      %p47 = por %p45, %p46
      %p48 = scmp.ne.s32.totalorder %s34, %s35
      %p49 = scmp.eq.s32.totalorder %s27, 1
      %p50 = por %p48, %p49
      %p52 = scmp.ne.s32.totalorder %s35, %s51
      %p53 = scmp.eq.s32.totalorder %s27, 0
      %p54 = por %p52, %p53
      %s56 = sadd.s32 %s55, 1
      %p59 = scmp.eq.s32.totalorder %s21, 1
      %p60 = scmp.ne.s32.totalorder %s55, %s57
      %p61 = scmp.eq.s32.totalorder %s21, 0
      %p62 = por %p60, %p61
      %p63 = scmp.ne.s32.totalorder %s55, %s57
      %p64 = scmp.eq.s32.totalorder %s26, 1
      %p65 = por %p63, %p64
      %p66 = scmp.ne.s32.totalorder %s57, %s58
      %p67 = scmp.eq.s32.totalorder %s26, 0
      %p68 = por %p66, %p67
      %p69 = scmp.ne.s32.totalorder %s57, %s58
      %p70 = scmp.eq.s32.totalorder %s27, 1
      %p71 = por %p69, %p70
      %p73 = scmp.ne.s32.totalorder %s58, %s72
      %p74 = scmp.eq.s32.totalorder %s27, 0
      %p75 = por %p73, %p74
      %s77 = sadd.s32 %s76, 1
      %p80 = scmp.eq.s32.totalorder %s21, 1
      %p81 = scmp.ne.s32.totalorder %s76, %s78
      %p82 = scmp.eq.s32.totalorder %s21, 0
      %p83 = por %p81, %p82
      %p84 = scmp.ne.s32.totalorder %s76, %s78
      %p85 = scmp.eq.s32.totalorder %s26, 1
      %p86 = por %p84, %p85
      %p87 = scmp.ne.s32.totalorder %s78, %s79
      %p88 = scmp.eq.s32.totalorder %s26, 0
      %p89 = por %p87, %p88
      %p90 = scmp.ne.s32.totalorder %s78, %s79
      %p91 = scmp.eq.s32.totalorder %s27, 1
      %p92 = por %p90, %p91
      %p94 = scmp.ne.s32.totalorder %s79, %s93
      %p95 = scmp.eq.s32.totalorder %s27, 0
      %p96 = por %p94, %p95
      %s97 = ssub.s32 %s21, %s28
      %p98 = scmp.eq.s32.totalorder %s97, 0
      %s100 = sadd.s32 %s99, 1
      %s101 = scalar_select %p98, %s99, %s100
      %p104 = pneg %p98
      %p105 = scmp.eq.s32.totalorder %s21, 1
      %p106 = por %p104, %p105
      %p107 = scmp.ne.s32.totalorder %s99, %s102
      %p108 = scmp.eq.s32.totalorder %s21, 0
      %p109 = por %p107, %p108
      %p110 = scmp.ne.s32.totalorder %s99, %s102
      %p111 = scmp.eq.s32.totalorder %s26, 1
      %p112 = por %p110, %p111
      %p113 = scmp.ne.s32.totalorder %s102, %s103
      %p114 = scmp.eq.s32.totalorder %s26, 0
      %p115 = por %p113, %p114
      %p116 = scmp.ne.s32.totalorder %s102, %s103
      %p117 = scmp.eq.s32.totalorder %s27, 1
      %p118 = por %p116, %p117
      %p120 = scmp.ne.s32.totalorder %s103, %s119
      %p121 = scmp.eq.s32.totalorder %s27, 0
      %p122 = por %p120, %p121
      %s123 = ssub.s32 %s21, %s28
      %p124 = scmp.eq.s32.totalorder %s123, 0
      %s126 = sadd.s32 %s125, 1
      %s127 = scalar_select %p124, %s125, %s126
      %p130 = pneg %p124
      %p131 = scmp.eq.s32.totalorder %s21, 1
      %p132 = por %p130, %p131
      %p133 = scmp.ne.s32.totalorder %s125, %s128
      %p134 = scmp.eq.s32.totalorder %s21, 0
      %p135 = por %p133, %p134
      %p136 = scmp.ne.s32.totalorder %s125, %s128
      %p137 = scmp.eq.s32.totalorder %s26, 1
      %p138 = por %p136, %p137
      %p139 = scmp.ne.s32.totalorder %s128, %s129
      %p140 = scmp.eq.s32.totalorder %s26, 0
      %p141 = por %p139, %p140
      %p142 = scmp.ne.s32.totalorder %s128, %s129
      %p143 = scmp.eq.s32.totalorder %s27, 1
      %p144 = por %p142, %p143
      %p146 = scmp.ne.s32.totalorder %s129, %s145
      %p147 = scmp.eq.s32.totalorder %s27, 0
      %p148 = por %p146, %p147
      %p149 = scmp.le.s32.totalorder 1, %s21
      %p150 = scmp.lt.s32.totalorder %s21, 3
      %p151 = pnand %p149, %p150
      %p152 = pneg %p151
      // Predicated region
      $region9: #{tpu_custom_call.1} parent=5 // pred_check
        _
      $region10: #{tpu_custom_call.1} parent=5 // pred_check_branch
        %154 = sbr.rel (%p151) target = $region12
      $region11: #{tpu_custom_call.1} parent=5 // pred_region
        %s155 = ssub.s32 %s21, 1
        // Predicated region
        $region13: #{tpu_custom_call.1} parent=11 // pred_check
          %p156 = pneg %p68
        $region14: #{tpu_custom_call.1} parent=11 // pred_check_branch
          %158 = sbr.rel (%p156) target = $region16
        $region15: #{tpu_custom_call.1} parent=11 // pred_region
          %s160 = ssub.s32 4096, 4096
          %161 = vsyncadd [#allocation6], %s160
          %s162 = sshll.u32 [#allocation5], 4
          %s163 = int_to_ptr.vmem [resolvable:$true] %s162
          %168 = dma.hbm_to_vmem [thread:$0]  %s1, 4096, %s163, [#allocation6], 128, 128, 8
        $region16: #{tpu_custom_call.1} parent=11 // pred_fallthru
          _
        // Predicated region
        $region17: #{tpu_custom_call.1} parent=11 // pred_check
          %p169 = pneg %p89
        $region18: #{tpu_custom_call.1} parent=11 // pred_check_branch
          %171 = sbr.rel (%p169) target = $region20
        $region19: #{tpu_custom_call.1} parent=11 // pred_region
          %s173 = ssub.s32 2048, 2048
          %174 = vsyncadd [#allocation6], %s173
          %s175 = sshll.u32 [#allocation7], 4
          %s176 = int_to_ptr.vmem [resolvable:$true] %s175
          %181 = dma.hbm_to_vmem [thread:$0]  %s2, 2048, %s176, [#allocation6], 64, 64, 4
        $region20: #{tpu_custom_call.1} parent=11 // pred_fallthru
          _
      $region12: #{tpu_custom_call.1} parent=5 // pred_fallthru
        _
      %p182 = scmp.lt.s32.totalorder %s21, 2
      // Predicated region
      $region21: #{tpu_custom_call.1} parent=5 // pred_check
        %p183 = pneg %p182
      $region22: #{tpu_custom_call.1} parent=5 // pred_check_branch
        %185 = sbr.rel (%p183) target = $region24
      $region23: #{tpu_custom_call.1} parent=5 // pred_region
        // Predicated region
        $region25: #{tpu_custom_call.1} parent=23 // pred_check
          %p186 = pneg %p41
        $region26: #{tpu_custom_call.1} parent=23 // pred_check_branch
          %188 = sbr.rel (%p186) target = $region28
        $region27: #{tpu_custom_call.1} parent=23 // pred_region
          %s189 = sand.u32 %s31, 1
          %s190 = scalar_lea.sflag [#allocation3], %s189
          %s191 = sand.u32 %s31, 1
          %s192 = smul.addr %s191, 256
          %s193 = scalar_lea.vmem [#allocation2], %s192
          %s195 = ssub.s32 4096, 4096
          %196 = vsyncadd %s190, %s195
          %s197 = smul.addr %s21, 64
          %s198 = smul.addr %s197, 64
          %s199 = scalar_lea.hbm %s0, %s198
          %s200 = sshll.u32 %s193, 4
          %s201 = int_to_ptr.vmem [resolvable:$true] %s200
          %206 = dma.hbm_to_vmem [thread:$0]  %s199, 4096, %s201, %s190, 128, 128, 8
        $region28: #{tpu_custom_call.1} parent=23 // pred_fallthru
          _
      $region24: #{tpu_custom_call.1} parent=5 // pred_fallthru
        _
      %p207 = scmp.le.s32.totalorder 1, %s21
      %p208 = scmp.lt.s32.totalorder %s21, 3
      %p209 = pnand %p207, %p208
      %p210 = pneg %p209
      // Predicated region
      $region29: #{tpu_custom_call.1} parent=5 // pred_check
        _
      $region30: #{tpu_custom_call.1} parent=5 // pred_check_branch
        %212 = sbr.rel (%p209) target = $region32
      $region31: #{tpu_custom_call.1} parent=5 // pred_region
        %s213 = ssub.s32 %s21, 1
        %s214 = sand.u32 %s34, 1
        %s215 = scalar_lea.sflag [#allocation3], %s214
        %s216 = sand.u32 %s34, 1
        %s217 = smul.addr %s216, 256
        %s218 = scalar_lea.vmem [#allocation2], %s217
        // Predicated region
        $region33: #{tpu_custom_call.1} parent=31 // pred_check
          %p219 = pneg %p47
        $region34: #{tpu_custom_call.1} parent=31 // pred_check_branch
          %221 = sbr.rel (%p219) target = $region36
        $region35: #{tpu_custom_call.1} parent=31 // pred_region
          %222 = dma.done %s215, 4096
        $region36: #{tpu_custom_call.1} parent=31 // pred_fallthru
          _
        // Predicated region
        $region37: #{tpu_custom_call.1} parent=31 // pred_check
          %p223 = pneg %p68
        $region38: #{tpu_custom_call.1} parent=31 // pred_check_branch
          %225 = sbr.rel (%p223) target = $region40
        $region39: #{tpu_custom_call.1} parent=31 // pred_region
          %226 = dma.done [#allocation6], 4096
        $region40: #{tpu_custom_call.1} parent=31 // pred_fallthru
          _
        // Predicated region
        $region41: #{tpu_custom_call.1} parent=31 // pred_check
          %p227 = pneg %p89
        $region42: #{tpu_custom_call.1} parent=31 // pred_check_branch
          %229 = sbr.rel (%p227) target = $region44
        $region43: #{tpu_custom_call.1} parent=31 // pred_region
          %230 = dma.done [#allocation6], 2048
        $region44: #{tpu_custom_call.1} parent=31 // pred_fallthru
          _
        %s231 = sand.u32 %s34, 1
        %s232 = scalar_lea.sflag [#allocation3], %s231
        %s233 = sand.u32 %s34, 1
        %s234 = smul.addr %s233, 256
        %s235 = scalar_lea.vmem [#allocation2], %s234
        %p236 = pneg %p47
        %p237 = pneg %p44
        %p238 = pneg %p68
        %p239 = pneg %p65
        %p240 = pneg %p89
        %p241 = pneg %p86
        %p242 = pneg %p115
        %p243 = pneg %p112
        %s244 = sand.u32 %s102, 1
        %s245 = scalar_lea.sflag [#allocation4], %s244
        %s246 = sand.u32 %s102, 1
        %s247 = smul.addr %s246, 256
        %s248 = scalar_lea.vmem [#allocation8], %s247
        %p249 = pneg %p141
        %p250 = pneg %p138
        %s251 = sand.u32 %s128, 1
        %s252 = scalar_lea.sflag [#allocation10], %s251
        %s253 = sand.u32 %s128, 1
        %s254 = smul.addr %s253, 256
        %s255 = scalar_lea.vmem [#allocation9], %s254
        %v257 = vld [vmem:[%s218] sm:$0xff]
        %v258 = vld [vmem:[%s218 + $0x8] sm:$0xff]
        %v259 = vld [vmem:[%s218 + $0x10] sm:$0xff]
        %v260 = vld [vmem:[%s218 + $0x18] sm:$0xff]
        %v261 = vld [vmem:[%s218 + $0x20] sm:$0xff]
        %v262 = vld [vmem:[%s218 + $0x28] sm:$0xff]
        %v263 = vld [vmem:[%s218 + $0x30] sm:$0xff]
        %v264 = vld [vmem:[%s218 + $0x38] sm:$0xff]
        %v265 = vld [vmem:[%s218 + $0x40] sm:$0xff]
        %v266 = vld [vmem:[%s218 + $0x48] sm:$0xff]
        %v267 = vld [vmem:[%s218 + $0x50] sm:$0xff]
        %v268 = vld [vmem:[%s218 + $0x58] sm:$0xff]
        %v269 = vld [vmem:[%s218 + $0x60] sm:$0xff]
        %v270 = vld [vmem:[%s218 + $0x68] sm:$0xff]
        %v271 = vld [vmem:[%s218 + $0x70] sm:$0xff]
        %v272 = vld [vmem:[%s218 + $0x78] sm:$0xff]
        %v273 = vld [vmem:[%s218 + $0x80] sm:$0xff]
        %v274 = vld [vmem:[%s218 + $0x88] sm:$0xff]
        %v275 = vld [vmem:[%s218 + $0x90] sm:$0xff]
        %v276 = vld [vmem:[%s218 + $0x98] sm:$0xff]
        %v277 = vld [vmem:[%s218 + $0xa0] sm:$0xff]
        %v278 = vld [vmem:[%s218 + $0xa8] sm:$0xff]
        %v279 = vld [vmem:[%s218 + $0xb0] sm:$0xff]
        %v280 = vld [vmem:[%s218 + $0xb8] sm:$0xff]
        %v281 = vld [vmem:[%s218 + $0xc0] sm:$0xff]
        %v282 = vld [vmem:[%s218 + $0xc8] sm:$0xff]
        %v283 = vld [vmem:[%s218 + $0xd0] sm:$0xff]
        %v284 = vld [vmem:[%s218 + $0xd8] sm:$0xff]
        %v285 = vld [vmem:[%s218 + $0xe0] sm:$0xff]
        %v286 = vld [vmem:[%s218 + $0xe8] sm:$0xff]
        %v287 = vld [vmem:[%s218 + $0xf0] sm:$0xff]
        %v288 = vld [vmem:[%s218 + $0xf8] sm:$0xff]
        %v289 = vld [vmem:[#allocation5] sm:$0xff]
        %v290 = vld [vmem:[#allocation5 + $0x8] sm:$0xff]
        %v291 = vld [vmem:[#allocation5 + $0x10] sm:$0xff]
        %v292 = vld [vmem:[#allocation5 + $0x18] sm:$0xff]
        %v293 = vld [vmem:[#allocation5 + $0x20] sm:$0xff]
        %v294 = vld [vmem:[#allocation5 + $0x28] sm:$0xff]
        %v295 = vld [vmem:[#allocation5 + $0x30] sm:$0xff]
        %v296 = vld [vmem:[#allocation5 + $0x38] sm:$0xff]
        %v297 = vld [vmem:[#allocation5 + $0x40] sm:$0xff]
        %v298 = vld [vmem:[#allocation5 + $0x48] sm:$0xff]
        %v299 = vld [vmem:[#allocation5 + $0x50] sm:$0xff]
        %v300 = vld [vmem:[#allocation5 + $0x58] sm:$0xff]
        %v301 = vld [vmem:[#allocation5 + $0x60] sm:$0xff]
        %v302 = vld [vmem:[#allocation5 + $0x68] sm:$0xff]
        %v303 = vld [vmem:[#allocation5 + $0x70] sm:$0xff]
        %v304 = vld [vmem:[#allocation5 + $0x78] sm:$0xff]
        %v305 = vld [vmem:[#allocation5 + $0x80] sm:$0xff]
        %v306 = vld [vmem:[#allocation5 + $0x88] sm:$0xff]
        %v307 = vld [vmem:[#allocation5 + $0x90] sm:$0xff]
        %v308 = vld [vmem:[#allocation5 + $0x98] sm:$0xff]
        %v309 = vld [vmem:[#allocation5 + $0xa0] sm:$0xff]
        %v310 = vld [vmem:[#allocation5 + $0xa8] sm:$0xff]
        %v311 = vld [vmem:[#allocation5 + $0xb0] sm:$0xff]
        %v312 = vld [vmem:[#allocation5 + $0xb8] sm:$0xff]
        %v313 = vld [vmem:[#allocation5 + $0xc0] sm:$0xff]
        %v314 = vld [vmem:[#allocation5 + $0xc8] sm:$0xff]
        %v315 = vld [vmem:[#allocation5 + $0xd0] sm:$0xff]
        %v316 = vld [vmem:[#allocation5 + $0xd8] sm:$0xff]
        %v317 = vld [vmem:[#allocation5 + $0xe0] sm:$0xff]
        %v318 = vld [vmem:[#allocation5 + $0xe8] sm:$0xff]
        %v319 = vld [vmem:[#allocation5 + $0xf0] sm:$0xff]
        %v320 = vld [vmem:[#allocation5 + $0xf8] sm:$0xff]
        %v321 = vld [vmem:[#allocation7] sm:$0xf]
        %v322 = vld [vmem:[#allocation7 + $0x4] sm:$0xf]
        %v323 = vld [vmem:[#allocation7 + $0x8] sm:$0xf]
        %v324 = vld [vmem:[#allocation7 + $0xc] sm:$0xf]
        %v325 = vld [vmem:[#allocation7 + $0x10] sm:$0xf]
        %v326 = vld [vmem:[#allocation7 + $0x14] sm:$0xf]
        %v327 = vld [vmem:[#allocation7 + $0x18] sm:$0xf]
        %v328 = vld [vmem:[#allocation7 + $0x1c] sm:$0xf]
        %v329 = vld [vmem:[#allocation7 + $0x20] sm:$0xf]
        %v330 = vld [vmem:[#allocation7 + $0x24] sm:$0xf]
        %v331 = vld [vmem:[#allocation7 + $0x28] sm:$0xf]
        %v332 = vld [vmem:[#allocation7 + $0x2c] sm:$0xf]
        %v333 = vld [vmem:[#allocation7 + $0x30] sm:$0xf]
        %v334 = vld [vmem:[#allocation7 + $0x34] sm:$0xf]
        %v335 = vld [vmem:[#allocation7 + $0x38] sm:$0xf]
        %v336 = vld [vmem:[#allocation7 + $0x3c] sm:$0xf]
        %v337 = vld [vmem:[#allocation7 + $0x40] sm:$0xf]
        %v338 = vld [vmem:[#allocation7 + $0x44] sm:$0xf]
        %v339 = vld [vmem:[#allocation7 + $0x48] sm:$0xf]
        %v340 = vld [vmem:[#allocation7 + $0x4c] sm:$0xf]
        %v341 = vld [vmem:[#allocation7 + $0x50] sm:$0xf]
        %v342 = vld [vmem:[#allocation7 + $0x54] sm:$0xf]
        %v343 = vld [vmem:[#allocation7 + $0x58] sm:$0xf]
        %v344 = vld [vmem:[#allocation7 + $0x5c] sm:$0xf]
        %v345 = vld [vmem:[#allocation7 + $0x60] sm:$0xf]
        %v346 = vld [vmem:[#allocation7 + $0x64] sm:$0xf]
        %v347 = vld [vmem:[#allocation7 + $0x68] sm:$0xf]
        %v348 = vld [vmem:[#allocation7 + $0x6c] sm:$0xf]
        %v349 = vld [vmem:[#allocation7 + $0x70] sm:$0xf]
        %v350 = vld [vmem:[#allocation7 + $0x74] sm:$0xf]
        %v351 = vld [vmem:[#allocation7 + $0x78] sm:$0xf]
        %v352 = vld [vmem:[#allocation7 + $0x7c] sm:$0xf]
        %v385 = vunpack.c.l.b16 %v289
        %v386 = vunpack.c.h.b16 %v289
        %v387 = vunpack.c.l.b16 %v290
        %v388 = vunpack.c.h.b16 %v290
        %v389 = vunpack.c.l.b16 %v291
        %v390 = vunpack.c.h.b16 %v291
        %v391 = vunpack.c.l.b16 %v292
        %v392 = vunpack.c.h.b16 %v292
        %v393 = vunpack.c.l.b16 %v293
        %v394 = vunpack.c.h.b16 %v293
        %v395 = vunpack.c.l.b16 %v294
        %v396 = vunpack.c.h.b16 %v294
        %v397 = vunpack.c.l.b16 %v295
        %v398 = vunpack.c.h.b16 %v295
        %v399 = vunpack.c.l.b16 %v296
        %v400 = vunpack.c.h.b16 %v296
        %v401 = vunpack.c.l.b16 %v297
        %v402 = vunpack.c.h.b16 %v297
        %v403 = vunpack.c.l.b16 %v298
        %v404 = vunpack.c.h.b16 %v298
        %v405 = vunpack.c.l.b16 %v299
        %v406 = vunpack.c.h.b16 %v299
        %v407 = vunpack.c.l.b16 %v300
        %v408 = vunpack.c.h.b16 %v300
        %v409 = vunpack.c.l.b16 %v301
        %v410 = vunpack.c.h.b16 %v301
        %v411 = vunpack.c.l.b16 %v302
        %v412 = vunpack.c.h.b16 %v302
        %v413 = vunpack.c.l.b16 %v303
        %v414 = vunpack.c.h.b16 %v303
        %v415 = vunpack.c.l.b16 %v304
        %v416 = vunpack.c.h.b16 %v304
        %v417 = vunpack.c.l.b16 %v305
        %v418 = vunpack.c.h.b16 %v305
        %v419 = vunpack.c.l.b16 %v306
        %v420 = vunpack.c.h.b16 %v306
        %v421 = vunpack.c.l.b16 %v307
        %v422 = vunpack.c.h.b16 %v307
        %v423 = vunpack.c.l.b16 %v308
        %v424 = vunpack.c.h.b16 %v308
        %v425 = vunpack.c.l.b16 %v309
        %v426 = vunpack.c.h.b16 %v309
        %v427 = vunpack.c.l.b16 %v310
        %v428 = vunpack.c.h.b16 %v310
        %v429 = vunpack.c.l.b16 %v311
        %v430 = vunpack.c.h.b16 %v311
        %v431 = vunpack.c.l.b16 %v312
        %v432 = vunpack.c.h.b16 %v312
        %v433 = vunpack.c.l.b16 %v313
        %v434 = vunpack.c.h.b16 %v313
        %v435 = vunpack.c.l.b16 %v314
        %v436 = vunpack.c.h.b16 %v314
        %v437 = vunpack.c.l.b16 %v315
        %v438 = vunpack.c.h.b16 %v315
        %v439 = vunpack.c.l.b16 %v316
        %v440 = vunpack.c.h.b16 %v316
        %v441 = vunpack.c.l.b16 %v317
        %v442 = vunpack.c.h.b16 %v317
        %v443 = vunpack.c.l.b16 %v318
        %v444 = vunpack.c.h.b16 %v318
        %v445 = vunpack.c.l.b16 %v319
        %v446 = vunpack.c.h.b16 %v319
        %v447 = vunpack.c.l.b16 %v320
        %v448 = vunpack.c.h.b16 %v320
        %v449 = vpack.c.b16 %v387, %v385
        %v450 = vpack.c.b16 %v388, %v386
        %v451 = vpack.c.b16 %v391, %v389
        %v452 = vpack.c.b16 %v392, %v390
        %v453 = vpack.c.b16 %v395, %v393
        %v454 = vpack.c.b16 %v396, %v394
        %v455 = vpack.c.b16 %v399, %v397
        %v456 = vpack.c.b16 %v400, %v398
        %v457 = vpack.c.b16 %v403, %v401
        %v458 = vpack.c.b16 %v404, %v402
        %v459 = vpack.c.b16 %v407, %v405
        %v460 = vpack.c.b16 %v408, %v406
        %v461 = vpack.c.b16 %v411, %v409
        %v462 = vpack.c.b16 %v412, %v410
        %v463 = vpack.c.b16 %v415, %v413
        %v464 = vpack.c.b16 %v416, %v414
        %v465 = vpack.c.b16 %v419, %v417
        %v466 = vpack.c.b16 %v420, %v418
        %v467 = vpack.c.b16 %v423, %v421
        %v468 = vpack.c.b16 %v424, %v422
        %v469 = vpack.c.b16 %v427, %v425
        %v470 = vpack.c.b16 %v428, %v426
        %v471 = vpack.c.b16 %v431, %v429
        %v472 = vpack.c.b16 %v432, %v430
        %v473 = vpack.c.b16 %v435, %v433
        %v474 = vpack.c.b16 %v436, %v434
        %v475 = vpack.c.b16 %v439, %v437
        %v476 = vpack.c.b16 %v440, %v438
        %v477 = vpack.c.b16 %v443, %v441
        %v478 = vpack.c.b16 %v444, %v442
        %v479 = vpack.c.b16 %v447, %v445
        %v480 = vpack.c.b16 %v448, %v446
        %513 = vxpose.xlu0.c.b16.start [1/8] %v449, 128
        %514 = vxpose.xlu0.c.b16.cont [2/8] %v451, 128
        %515 = vxpose.xlu0.c.b16.cont [3/8] %v453, 128
        %516 = vxpose.xlu0.c.b16.cont [4/8] %v455, 128
        %517 = vxpose.xlu0.c.b16.cont [5/8] %v457, 128
        %518 = vxpose.xlu0.c.b16.cont [6/8] %v459, 128
        %519 = vxpose.xlu0.c.b16.cont [7/8] %v461, 128
        %520 = vxpose.xlu0.c.b16.end [8/8] %v463, 128
        %v521 = vpop.trf.xlu0
        %v522 = vpop.trf.xlu0
        %v523 = vpop.trf.xlu0
        %v524 = vpop.trf.xlu0
        %v525 = vpop.trf.xlu0
        %v526 = vpop.trf.xlu0
        %v527 = vpop.trf.xlu0
        %v528 = vpop.trf.xlu0
        %529 = vxpose.xlu0.c.b16.start [1/8] %v450, 128
        %530 = vxpose.xlu0.c.b16.cont [2/8] %v452, 128
        %531 = vxpose.xlu0.c.b16.cont [3/8] %v454, 128
        %532 = vxpose.xlu0.c.b16.cont [4/8] %v456, 128
        %533 = vxpose.xlu0.c.b16.cont [5/8] %v458, 128
        %534 = vxpose.xlu0.c.b16.cont [6/8] %v460, 128
        %535 = vxpose.xlu0.c.b16.cont [7/8] %v462, 128
        %536 = vxpose.xlu0.c.b16.end [8/8] %v464, 128
        %v537 = vpop.trf.xlu0
        %v538 = vpop.trf.xlu0
        %v539 = vpop.trf.xlu0
        %v540 = vpop.trf.xlu0
        %v541 = vpop.trf.xlu0
        %v542 = vpop.trf.xlu0
        %v543 = vpop.trf.xlu0
        %v544 = vpop.trf.xlu0
        %545 = vxpose.xlu0.c.b16.start [1/8] %v465, 128
        %546 = vxpose.xlu0.c.b16.cont [2/8] %v467, 128
        %547 = vxpose.xlu0.c.b16.cont [3/8] %v469, 128
        %548 = vxpose.xlu0.c.b16.cont [4/8] %v471, 128
        %549 = vxpose.xlu0.c.b16.cont [5/8] %v473, 128
        %550 = vxpose.xlu0.c.b16.cont [6/8] %v475, 128
        %551 = vxpose.xlu0.c.b16.cont [7/8] %v477, 128
        %552 = vxpose.xlu0.c.b16.end [8/8] %v479, 128
        %v553 = vpop.trf.xlu0
        %v554 = vpop.trf.xlu0
        %v555 = vpop.trf.xlu0
        %v556 = vpop.trf.xlu0
        %v557 = vpop.trf.xlu0
        %v558 = vpop.trf.xlu0
        %v559 = vpop.trf.xlu0
        %v560 = vpop.trf.xlu0
        %561 = vxpose.xlu0.c.b16.start [1/8] %v466, 128
        %562 = vxpose.xlu0.c.b16.cont [2/8] %v468, 128
        %563 = vxpose.xlu0.c.b16.cont [3/8] %v470, 128
        %564 = vxpose.xlu0.c.b16.cont [4/8] %v472, 128
        %565 = vxpose.xlu0.c.b16.cont [5/8] %v474, 128
        %566 = vxpose.xlu0.c.b16.cont [6/8] %v476, 128
        %567 = vxpose.xlu0.c.b16.cont [7/8] %v478, 128
        %568 = vxpose.xlu0.c.b16.end [8/8] %v480, 128
        %v569 = vpop.trf.xlu0
        %v570 = vpop.trf.xlu0
        %v571 = vpop.trf.xlu0
        %v572 = vpop.trf.xlu0
        %v573 = vpop.trf.xlu0
        %v574 = vpop.trf.xlu0
        %v575 = vpop.trf.xlu0
        %v576 = vpop.trf.xlu0
        %v609 = vunpack.c.l.b16 %v257
        %v610 = vunpack.c.h.b16 %v257
        %v611 = vunpack.c.l.b16 %v258
        %v612 = vunpack.c.h.b16 %v258
        %v613 = vunpack.c.l.b16 %v259
        %v614 = vunpack.c.h.b16 %v259
        %v615 = vunpack.c.l.b16 %v260
        %v616 = vunpack.c.h.b16 %v260
        %v617 = vunpack.c.l.b16 %v261
        %v618 = vunpack.c.h.b16 %v261
        %v619 = vunpack.c.l.b16 %v262
        %v620 = vunpack.c.h.b16 %v262
        %v621 = vunpack.c.l.b16 %v263
        %v622 = vunpack.c.h.b16 %v263
        %v623 = vunpack.c.l.b16 %v264
        %v624 = vunpack.c.h.b16 %v264
        %v625 = vunpack.c.l.b16 %v265
        %v626 = vunpack.c.h.b16 %v265
        %v627 = vunpack.c.l.b16 %v266
        %v628 = vunpack.c.h.b16 %v266
        %v629 = vunpack.c.l.b16 %v267
        %v630 = vunpack.c.h.b16 %v267
        %v631 = vunpack.c.l.b16 %v268
        %v632 = vunpack.c.h.b16 %v268
        %v633 = vunpack.c.l.b16 %v269
        %v634 = vunpack.c.h.b16 %v269
        %v635 = vunpack.c.l.b16 %v270
        %v636 = vunpack.c.h.b16 %v270
        %v637 = vunpack.c.l.b16 %v271
        %v638 = vunpack.c.h.b16 %v271
        %v639 = vunpack.c.l.b16 %v272
        %v640 = vunpack.c.h.b16 %v272
        %v641 = vunpack.c.l.b16 %v273
        %v642 = vunpack.c.h.b16 %v273
        %v643 = vunpack.c.l.b16 %v274
        %v644 = vunpack.c.h.b16 %v274
        %v645 = vunpack.c.l.b16 %v275
        %v646 = vunpack.c.h.b16 %v275
        %v647 = vunpack.c.l.b16 %v276
        %v648 = vunpack.c.h.b16 %v276
        %v649 = vunpack.c.l.b16 %v277
        %v650 = vunpack.c.h.b16 %v277
        %v651 = vunpack.c.l.b16 %v278
        %v652 = vunpack.c.h.b16 %v278
        %v653 = vunpack.c.l.b16 %v279
        %v654 = vunpack.c.h.b16 %v279
        %v655 = vunpack.c.l.b16 %v280
        %v656 = vunpack.c.h.b16 %v280
        %v657 = vunpack.c.l.b16 %v281
        %v658 = vunpack.c.h.b16 %v281
        %v659 = vunpack.c.l.b16 %v282
        %v660 = vunpack.c.h.b16 %v282
        %v661 = vunpack.c.l.b16 %v283
        %v662 = vunpack.c.h.b16 %v283
        %v663 = vunpack.c.l.b16 %v284
        %v664 = vunpack.c.h.b16 %v284
        %v665 = vunpack.c.l.b16 %v285
        %v666 = vunpack.c.h.b16 %v285
        %v667 = vunpack.c.l.b16 %v286
        %v668 = vunpack.c.h.b16 %v286
        %v669 = vunpack.c.l.b16 %v287
        %v670 = vunpack.c.h.b16 %v287
        %v671 = vunpack.c.l.b16 %v288
        %v672 = vunpack.c.h.b16 %v288
        %v673 = vpack.c.b16 %v611, %v609
        %v674 = vpack.c.b16 %v612, %v610
        %v675 = vpack.c.b16 %v615, %v613
        %v676 = vpack.c.b16 %v616, %v614
        %v677 = vpack.c.b16 %v619, %v617
        %v678 = vpack.c.b16 %v620, %v618
        %v679 = vpack.c.b16 %v623, %v621
        %v680 = vpack.c.b16 %v624, %v622
        %v681 = vpack.c.b16 %v627, %v625
        %v682 = vpack.c.b16 %v628, %v626
        %v683 = vpack.c.b16 %v631, %v629
        %v684 = vpack.c.b16 %v632, %v630
        %v685 = vpack.c.b16 %v635, %v633
        %v686 = vpack.c.b16 %v636, %v634
        %v687 = vpack.c.b16 %v639, %v637
        %v688 = vpack.c.b16 %v640, %v638
        %v689 = vpack.c.b16 %v643, %v641
        %v690 = vpack.c.b16 %v644, %v642
        %v691 = vpack.c.b16 %v647, %v645
        %v692 = vpack.c.b16 %v648, %v646
        %v693 = vpack.c.b16 %v651, %v649
        %v694 = vpack.c.b16 %v652, %v650
        %v695 = vpack.c.b16 %v655, %v653
        %v696 = vpack.c.b16 %v656, %v654
        %v697 = vpack.c.b16 %v659, %v657
        %v698 = vpack.c.b16 %v660, %v658
        %v699 = vpack.c.b16 %v663, %v661
        %v700 = vpack.c.b16 %v664, %v662
        %v701 = vpack.c.b16 %v667, %v665
        %v702 = vpack.c.b16 %v668, %v666
        %v703 = vpack.c.b16 %v671, %v669
        %v704 = vpack.c.b16 %v672, %v670
        %737 = vmatprep.subr.bf16.mxu0 %v674
        %738 = vmatpush1.bf16.msra.mxu0 %v673
        %739 = vmatprep.subr.bf16.mxu0 %v676
        %740 = vmatpush1.bf16.msra.mxu0 %v675
        %741 = vmatprep.subr.bf16.mxu0 %v678
        %742 = vmatpush1.bf16.msra.mxu0 %v677
        %743 = vmatprep.subr.bf16.mxu0 %v680
        %744 = vmatpush1.bf16.msra.mxu0 %v679
        %745 = vmatprep.subr.bf16.mxu0 %v682
        %746 = vmatpush1.bf16.msra.mxu0 %v681
        %747 = vmatprep.subr.bf16.mxu0 %v684
        %748 = vmatpush1.bf16.msra.mxu0 %v683
        %749 = vmatprep.subr.bf16.mxu0 %v686
        %750 = vmatpush1.bf16.msra.mxu0 %v685
        %751 = vmatprep.subr.bf16.mxu0 %v688
        %752 = vmatpush1.bf16.msra.mxu0 %v687
        %753 = vmatprep.subr.bf16.mxu0 %v690
        %754 = vmatpush1.bf16.msra.mxu0 %v689
        %755 = vmatprep.subr.bf16.mxu0 %v692
        %756 = vmatpush1.bf16.msra.mxu0 %v691
        %757 = vmatprep.subr.bf16.mxu0 %v694
        %758 = vmatpush1.bf16.msra.mxu0 %v693
        %759 = vmatprep.subr.bf16.mxu0 %v696
        %760 = vmatpush1.bf16.msra.mxu0 %v695
        %761 = vmatprep.subr.bf16.mxu0 %v698
        %762 = vmatpush1.bf16.msra.mxu0 %v697
        %763 = vmatprep.subr.bf16.mxu0 %v700
        %764 = vmatpush1.bf16.msra.mxu0 %v699
        %765 = vmatprep.subr.bf16.mxu0 %v702
        %766 = vmatpush1.bf16.msra.mxu0 %v701
        %767 = vmatprep.subr.bf16.mxu0 %v704
        %768 = vmatpush1.bf16.msra.mxu0 %v703
        %769 = vmatprep.mubr.bf16.mxu0 %v553
        %770 = vmatmul.mubr.bf16.gmra.mrb[0].mxu0 %v521
        %v771 = vpop.f32.mrb[0].mxu0
        %v772 = vadd.f32 0.0, %v771
        %v773 = vpop.f32.mrb[0].mxu0
        %v774 = vadd.f32 0.0, %v773
        %v775 = vpop.f32.mrb[0].mxu0
        %v776 = vadd.f32 0.0, %v775
        %v777 = vpop.f32.mrb[0].mxu0
        %v778 = vadd.f32 0.0, %v777
        %779 = vmatprep.mubr.bf16.mxu0 %v554
        %780 = vmatmul.mubr.bf16.gmra.mrb[0].mxu0 %v522
        %v781 = vpop.f32.mrb[0].mxu0
        %v782 = vadd.f32 0.0, %v781
        %v783 = vpop.f32.mrb[0].mxu0
        %v784 = vadd.f32 0.0, %v783
        %v785 = vpop.f32.mrb[0].mxu0
        %v786 = vadd.f32 0.0, %v785
        %v787 = vpop.f32.mrb[0].mxu0
        %v788 = vadd.f32 0.0, %v787
        %789 = vmatprep.mubr.bf16.mxu0 %v555
        %790 = vmatmul.mubr.bf16.gmra.mrb[0].mxu0 %v523
        %v791 = vpop.f32.mrb[0].mxu0
        %v792 = vadd.f32 0.0, %v791
        %v793 = vpop.f32.mrb[0].mxu0
        %v794 = vadd.f32 0.0, %v793
        %v795 = vpop.f32.mrb[0].mxu0
        %v796 = vadd.f32 0.0, %v795
        %v797 = vpop.f32.mrb[0].mxu0
        %v798 = vadd.f32 0.0, %v797
        %799 = vmatprep.mubr.bf16.mxu0 %v556
        %800 = vmatmul.mubr.bf16.gmra.mrb[0].mxu0 %v524
        %v801 = vpop.f32.mrb[0].mxu0
        %v802 = vadd.f32 0.0, %v801
        %v803 = vpop.f32.mrb[0].mxu0
        %v804 = vadd.f32 0.0, %v803
        %v805 = vpop.f32.mrb[0].mxu0
        %v806 = vadd.f32 0.0, %v805
        %v807 = vpop.f32.mrb[0].mxu0
        %v808 = vadd.f32 0.0, %v807
        %809 = vmatprep.mubr.bf16.mxu0 %v557
        %810 = vmatmul.mubr.bf16.gmra.mrb[0].mxu0 %v525
        %v811 = vpop.f32.mrb[0].mxu0
        %v812 = vadd.f32 0.0, %v811
        %v813 = vpop.f32.mrb[0].mxu0
        %v814 = vadd.f32 0.0, %v813
        %v815 = vpop.f32.mrb[0].mxu0
        %v816 = vadd.f32 0.0, %v815
        %v817 = vpop.f32.mrb[0].mxu0
        %v818 = vadd.f32 0.0, %v817
        %819 = vmatprep.mubr.bf16.mxu0 %v558
        %820 = vmatmul.mubr.bf16.gmra.mrb[0].mxu0 %v526
        %v821 = vpop.f32.mrb[0].mxu0
        %v822 = vadd.f32 0.0, %v821
        %v823 = vpop.f32.mrb[0].mxu0
        %v824 = vadd.f32 0.0, %v823
        %v825 = vpop.f32.mrb[0].mxu0
        %v826 = vadd.f32 0.0, %v825
        %v827 = vpop.f32.mrb[0].mxu0
        %v828 = vadd.f32 0.0, %v827
        %829 = vmatprep.mubr.bf16.mxu0 %v559
        %830 = vmatmul.mubr.bf16.gmra.mrb[0].mxu0 %v527
        %v831 = vpop.f32.mrb[0].mxu0
        %v832 = vadd.f32 0.0, %v831
        %v833 = vpop.f32.mrb[0].mxu0
        %v834 = vadd.f32 0.0, %v833
        %v835 = vpop.f32.mrb[0].mxu0
        %v836 = vadd.f32 0.0, %v835
        %v837 = vpop.f32.mrb[0].mxu0
        %v838 = vadd.f32 0.0, %v837
        %839 = vmatprep.mubr.bf16.mxu0 %v560
        %840 = vmatmul.mubr.bf16.gmra.mrb[0].mxu0 %v528
        %v841 = vpop.f32.mrb[0].mxu0
        %v842 = vadd.f32 0.0, %v841
        %v843 = vpop.f32.mrb[0].mxu0
        %v844 = vadd.f32 0.0, %v843
        %v845 = vpop.f32.mrb[0].mxu0
        %v846 = vadd.f32 0.0, %v845
        %v847 = vpop.f32.mrb[0].mxu0
        %v848 = vadd.f32 0.0, %v847
        %849 = vmatprep.mubr.bf16.mxu0 %v569
        %850 = vmatmul.mubr.bf16.gmra.mrb[0].mxu0 %v537
        %v851 = vpop.f32.mrb[0].mxu0
        %v852 = vadd.f32 0.0, %v851
        %v853 = vpop.f32.mrb[0].mxu0
        %v854 = vadd.f32 0.0, %v853
        %v855 = vpop.f32.mrb[0].mxu0
        %v856 = vadd.f32 0.0, %v855
        %v857 = vpop.f32.mrb[0].mxu0
        %v858 = vadd.f32 0.0, %v857
        %859 = vmatprep.mubr.bf16.mxu0 %v570
        %860 = vmatmul.mubr.bf16.gmra.mrb[0].mxu0 %v538
        %v861 = vpop.f32.mrb[0].mxu0
        %v862 = vadd.f32 0.0, %v861
        %v863 = vpop.f32.mrb[0].mxu0
        %v864 = vadd.f32 0.0, %v863
        %v865 = vpop.f32.mrb[0].mxu0
        %v866 = vadd.f32 0.0, %v865
        %v867 = vpop.f32.mrb[0].mxu0
        %v868 = vadd.f32 0.0, %v867
        %869 = vmatprep.mubr.bf16.mxu0 %v571
        %870 = vmatmul.mubr.bf16.gmra.mrb[0].mxu0 %v539
        %v871 = vpop.f32.mrb[0].mxu0
        %v872 = vadd.f32 0.0, %v871
        %v873 = vpop.f32.mrb[0].mxu0
        %v874 = vadd.f32 0.0, %v873
        %v875 = vpop.f32.mrb[0].mxu0
        %v876 = vadd.f32 0.0, %v875
        %v877 = vpop.f32.mrb[0].mxu0
        %v878 = vadd.f32 0.0, %v877
        %879 = vmatprep.mubr.bf16.mxu0 %v572
        %880 = vmatmul.mubr.bf16.gmra.mrb[0].mxu0 %v540
        %v881 = vpop.f32.mrb[0].mxu0
        %v882 = vadd.f32 0.0, %v881
        %v883 = vpop.f32.mrb[0].mxu0
        %v884 = vadd.f32 0.0, %v883
        %v885 = vpop.f32.mrb[0].mxu0
        %v886 = vadd.f32 0.0, %v885
        %v887 = vpop.f32.mrb[0].mxu0
        %v888 = vadd.f32 0.0, %v887
        %889 = vmatprep.mubr.bf16.mxu0 %v573
        %890 = vmatmul.mubr.bf16.gmra.mrb[0].mxu0 %v541
        %v891 = vpop.f32.mrb[0].mxu0
        %v892 = vadd.f32 0.0, %v891
        %v893 = vpop.f32.mrb[0].mxu0
        %v894 = vadd.f32 0.0, %v893
        %v895 = vpop.f32.mrb[0].mxu0
        %v896 = vadd.f32 0.0, %v895
        %v897 = vpop.f32.mrb[0].mxu0
        %v898 = vadd.f32 0.0, %v897
        %899 = vmatprep.mubr.bf16.mxu0 %v574
        %900 = vmatmul.mubr.bf16.gmra.mrb[0].mxu0 %v542
        %v901 = vpop.f32.mrb[0].mxu0
        %v902 = vadd.f32 0.0, %v901
        %v903 = vpop.f32.mrb[0].mxu0
        %v904 = vadd.f32 0.0, %v903
        %v905 = vpop.f32.mrb[0].mxu0
        %v906 = vadd.f32 0.0, %v905
        %v907 = vpop.f32.mrb[0].mxu0
        %v908 = vadd.f32 0.0, %v907
        %909 = vmatprep.mubr.bf16.mxu0 %v575
        %910 = vmatmul.mubr.bf16.gmra.mrb[0].mxu0 %v543
        %v911 = vpop.f32.mrb[0].mxu0
        %v912 = vadd.f32 0.0, %v911
        %v913 = vpop.f32.mrb[0].mxu0
        %v914 = vadd.f32 0.0, %v913
        %v915 = vpop.f32.mrb[0].mxu0
        %v916 = vadd.f32 0.0, %v915
        %v917 = vpop.f32.mrb[0].mxu0
        %v918 = vadd.f32 0.0, %v917
        %919 = vmatprep.mubr.bf16.mxu0 %v576
        %920 = vmatmul.mubr.bf16.gmra.mrb[0].mxu0 %v544
        %v921 = vpop.f32.mrb[0].mxu0
        %v922 = vadd.f32 0.0, %v921
        %v923 = vpop.f32.mrb[0].mxu0
        %v924 = vadd.f32 0.0, %v923
        %v925 = vpop.f32.mrb[0].mxu0
        %v926 = vadd.f32 0.0, %v925
        %v927 = vpop.f32.mrb[0].mxu0
        %v928 = vadd.f32 0.0, %v927
        %929 = vdwg.mxu0
        %vm930 = vcmp.ge.f32.partialorder %v772, 0.0
        %vm931 = vcmp.ge.f32.partialorder %v774, 0.0
        %vm932 = vcmp.ge.f32.partialorder %v776, 0.0
        %vm933 = vcmp.ge.f32.partialorder %v778, 0.0
        %vm934 = vcmp.ge.f32.partialorder %v782, 0.0
        %vm935 = vcmp.ge.f32.partialorder %v784, 0.0
        %vm936 = vcmp.ge.f32.partialorder %v786, 0.0
        %vm937 = vcmp.ge.f32.partialorder %v788, 0.0
        %vm938 = vcmp.ge.f32.partialorder %v792, 0.0
        %vm939 = vcmp.ge.f32.partialorder %v794, 0.0
        %vm940 = vcmp.ge.f32.partialorder %v796, 0.0
        %vm941 = vcmp.ge.f32.partialorder %v798, 0.0
        %vm942 = vcmp.ge.f32.partialorder %v802, 0.0
        %vm943 = vcmp.ge.f32.partialorder %v804, 0.0
        %vm944 = vcmp.ge.f32.partialorder %v806, 0.0
        %vm945 = vcmp.ge.f32.partialorder %v808, 0.0
        %vm946 = vcmp.ge.f32.partialorder %v812, 0.0
        %vm947 = vcmp.ge.f32.partialorder %v814, 0.0
        %vm948 = vcmp.ge.f32.partialorder %v816, 0.0
        %vm949 = vcmp.ge.f32.partialorder %v818, 0.0
        %vm950 = vcmp.ge.f32.partialorder %v822, 0.0
        %vm951 = vcmp.ge.f32.partialorder %v824, 0.0
        %vm952 = vcmp.ge.f32.partialorder %v826, 0.0
        %vm953 = vcmp.ge.f32.partialorder %v828, 0.0
        %vm954 = vcmp.ge.f32.partialorder %v832, 0.0
        %vm955 = vcmp.ge.f32.partialorder %v834, 0.0
        %vm956 = vcmp.ge.f32.partialorder %v836, 0.0
        %vm957 = vcmp.ge.f32.partialorder %v838, 0.0
        %vm958 = vcmp.ge.f32.partialorder %v842, 0.0
        %vm959 = vcmp.ge.f32.partialorder %v844, 0.0
        %vm960 = vcmp.ge.f32.partialorder %v846, 0.0
        %vm961 = vcmp.ge.f32.partialorder %v848, 0.0
        %vm962 = vcmp.ge.f32.partialorder %v852, 0.0
        %vm963 = vcmp.ge.f32.partialorder %v854, 0.0
        %vm964 = vcmp.ge.f32.partialorder %v856, 0.0
        %vm965 = vcmp.ge.f32.partialorder %v858, 0.0
        %vm966 = vcmp.ge.f32.partialorder %v862, 0.0
        %vm967 = vcmp.ge.f32.partialorder %v864, 0.0
        %vm968 = vcmp.ge.f32.partialorder %v866, 0.0
        %vm969 = vcmp.ge.f32.partialorder %v868, 0.0
        %vm970 = vcmp.ge.f32.partialorder %v872, 0.0
        %vm971 = vcmp.ge.f32.partialorder %v874, 0.0
        %vm972 = vcmp.ge.f32.partialorder %v876, 0.0
        %vm973 = vcmp.ge.f32.partialorder %v878, 0.0
        %vm974 = vcmp.ge.f32.partialorder %v882, 0.0
        %vm975 = vcmp.ge.f32.partialorder %v884, 0.0
        %vm976 = vcmp.ge.f32.partialorder %v886, 0.0
        %vm977 = vcmp.ge.f32.partialorder %v888, 0.0
        %vm978 = vcmp.ge.f32.partialorder %v892, 0.0
        %vm979 = vcmp.ge.f32.partialorder %v894, 0.0
        %vm980 = vcmp.ge.f32.partialorder %v896, 0.0
        %vm981 = vcmp.ge.f32.partialorder %v898, 0.0
        %vm982 = vcmp.ge.f32.partialorder %v902, 0.0
        %vm983 = vcmp.ge.f32.partialorder %v904, 0.0
        %vm984 = vcmp.ge.f32.partialorder %v906, 0.0
        %vm985 = vcmp.ge.f32.partialorder %v908, 0.0
        %vm986 = vcmp.ge.f32.partialorder %v912, 0.0
        %vm987 = vcmp.ge.f32.partialorder %v914, 0.0
        %vm988 = vcmp.ge.f32.partialorder %v916, 0.0
        %vm989 = vcmp.ge.f32.partialorder %v918, 0.0
        %vm990 = vcmp.ge.f32.partialorder %v922, 0.0
        %vm991 = vcmp.ge.f32.partialorder %v924, 0.0
        %vm992 = vcmp.ge.f32.partialorder %v926, 0.0
        %vm993 = vcmp.ge.f32.partialorder %v928, 0.0
        %v994 = vmul.f32 %v772, 0.01
        %v995 = vmul.f32 %v774, 0.01
        %v996 = vmul.f32 %v776, 0.01
        %v997 = vmul.f32 %v778, 0.01
        %v998 = vmul.f32 %v782, 0.01
        %v999 = vmul.f32 %v784, 0.01
        %v1000 = vmul.f32 %v786, 0.01
        %v1001 = vmul.f32 %v788, 0.01
        %v1002 = vmul.f32 %v792, 0.01
        %v1003 = vmul.f32 %v794, 0.01
        %v1004 = vmul.f32 %v796, 0.01
        %v1005 = vmul.f32 %v798, 0.01
        %v1006 = vmul.f32 %v802, 0.01
        %v1007 = vmul.f32 %v804, 0.01
        %v1008 = vmul.f32 %v806, 0.01
        %v1009 = vmul.f32 %v808, 0.01
        %v1010 = vmul.f32 %v812, 0.01
        %v1011 = vmul.f32 %v814, 0.01
        %v1012 = vmul.f32 %v816, 0.01
        %v1013 = vmul.f32 %v818, 0.01
        %v1014 = vmul.f32 %v822, 0.01
        %v1015 = vmul.f32 %v824, 0.01
        %v1016 = vmul.f32 %v826, 0.01
        %v1017 = vmul.f32 %v828, 0.01
        %v1018 = vmul.f32 %v832, 0.01
        %v1019 = vmul.f32 %v834, 0.01
        %v1020 = vmul.f32 %v836, 0.01
        %v1021 = vmul.f32 %v838, 0.01
        %v1022 = vmul.f32 %v842, 0.01
        %v1023 = vmul.f32 %v844, 0.01
        %v1024 = vmul.f32 %v846, 0.01
        %v1025 = vmul.f32 %v848, 0.01
        %v1026 = vmul.f32 %v852, 0.01
        %v1027 = vmul.f32 %v854, 0.01
        %v1028 = vmul.f32 %v856, 0.01
        %v1029 = vmul.f32 %v858, 0.01
        %v1030 = vmul.f32 %v862, 0.01
        %v1031 = vmul.f32 %v864, 0.01
        %v1032 = vmul.f32 %v866, 0.01
        %v1033 = vmul.f32 %v868, 0.01
        %v1034 = vmul.f32 %v872, 0.01
        %v1035 = vmul.f32 %v874, 0.01
        %v1036 = vmul.f32 %v876, 0.01
        %v1037 = vmul.f32 %v878, 0.01
        %v1038 = vmul.f32 %v882, 0.01
        %v1039 = vmul.f32 %v884, 0.01
        %v1040 = vmul.f32 %v886, 0.01
        %v1041 = vmul.f32 %v888, 0.01
        %v1042 = vmul.f32 %v892, 0.01
        %v1043 = vmul.f32 %v894, 0.01
        %v1044 = vmul.f32 %v896, 0.01
        %v1045 = vmul.f32 %v898, 0.01
        %v1046 = vmul.f32 %v902, 0.01
        %v1047 = vmul.f32 %v904, 0.01
        %v1048 = vmul.f32 %v906, 0.01
        %v1049 = vmul.f32 %v908, 0.01
        %v1050 = vmul.f32 %v912, 0.01
        %v1051 = vmul.f32 %v914, 0.01
        %v1052 = vmul.f32 %v916, 0.01
        %v1053 = vmul.f32 %v918, 0.01
        %v1054 = vmul.f32 %v922, 0.01
        %v1055 = vmul.f32 %v924, 0.01
        %v1056 = vmul.f32 %v926, 0.01
        %v1057 = vmul.f32 %v928, 0.01
        %v1058 = vsel %vm930, %v772, %v994
        %v1059 = vsel %vm931, %v774, %v995
        %v1060 = vsel %vm932, %v776, %v996
        %v1061 = vsel %vm933, %v778, %v997
        %v1062 = vsel %vm934, %v782, %v998
        %v1063 = vsel %vm935, %v784, %v999
        %v1064 = vsel %vm936, %v786, %v1000
        %v1065 = vsel %vm937, %v788, %v1001
        %v1066 = vsel %vm938, %v792, %v1002
        %v1067 = vsel %vm939, %v794, %v1003
        %v1068 = vsel %vm940, %v796, %v1004
        %v1069 = vsel %vm941, %v798, %v1005
        %v1070 = vsel %vm942, %v802, %v1006
        %v1071 = vsel %vm943, %v804, %v1007
        %v1072 = vsel %vm944, %v806, %v1008
        %v1073 = vsel %vm945, %v808, %v1009
        %v1074 = vsel %vm946, %v812, %v1010
        %v1075 = vsel %vm947, %v814, %v1011
        %v1076 = vsel %vm948, %v816, %v1012
        %v1077 = vsel %vm949, %v818, %v1013
        %v1078 = vsel %vm950, %v822, %v1014
        %v1079 = vsel %vm951, %v824, %v1015
        %v1080 = vsel %vm952, %v826, %v1016
        %v1081 = vsel %vm953, %v828, %v1017
        %v1082 = vsel %vm954, %v832, %v1018
        %v1083 = vsel %vm955, %v834, %v1019
        %v1084 = vsel %vm956, %v836, %v1020
        %v1085 = vsel %vm957, %v838, %v1021
        %v1086 = vsel %vm958, %v842, %v1022
        %v1087 = vsel %vm959, %v844, %v1023
        %v1088 = vsel %vm960, %v846, %v1024
        %v1089 = vsel %vm961, %v848, %v1025
        %v1090 = vsel %vm962, %v852, %v1026
        %v1091 = vsel %vm963, %v854, %v1027
        %v1092 = vsel %vm964, %v856, %v1028
        %v1093 = vsel %vm965, %v858, %v1029
        %v1094 = vsel %vm966, %v862, %v1030
        %v1095 = vsel %vm967, %v864, %v1031
        %v1096 = vsel %vm968, %v866, %v1032
        %v1097 = vsel %vm969, %v868, %v1033
        %v1098 = vsel %vm970, %v872, %v1034
        %v1099 = vsel %vm971, %v874, %v1035
        %v1100 = vsel %vm972, %v876, %v1036
        %v1101 = vsel %vm973, %v878, %v1037
        %v1102 = vsel %vm974, %v882, %v1038
        %v1103 = vsel %vm975, %v884, %v1039
        %v1104 = vsel %vm976, %v886, %v1040
        %v1105 = vsel %vm977, %v888, %v1041
        %v1106 = vsel %vm978, %v892, %v1042
        %v1107 = vsel %vm979, %v894, %v1043
        %v1108 = vsel %vm980, %v896, %v1044
        %v1109 = vsel %vm981, %v898, %v1045
        %v1110 = vsel %vm982, %v902, %v1046
        %v1111 = vsel %vm983, %v904, %v1047
        %v1112 = vsel %vm984, %v906, %v1048
        %v1113 = vsel %vm985, %v908, %v1049
        %v1114 = vsel %vm986, %v912, %v1050
        %v1115 = vsel %vm987, %v914, %v1051
        %v1116 = vsel %vm988, %v916, %v1052
        %v1117 = vsel %vm989, %v918, %v1053
        %v1118 = vsel %vm990, %v922, %v1054
        %v1119 = vsel %vm991, %v924, %v1055
        %v1120 = vsel %vm992, %v926, %v1056
        %v1121 = vsel %vm993, %v928, %v1057
        %v1122 = vpack.c.bf16 %v1060, %v1058
        %v1123 = vpack.c.bf16 %v1061, %v1059
        %v1124 = vpack.c.bf16 %v1064, %v1062
        %v1125 = vpack.c.bf16 %v1065, %v1063
        %v1126 = vpack.c.bf16 %v1068, %v1066
        %v1127 = vpack.c.bf16 %v1069, %v1067
        %v1128 = vpack.c.bf16 %v1072, %v1070
        %v1129 = vpack.c.bf16 %v1073, %v1071
        %v1130 = vpack.c.bf16 %v1076, %v1074
        %v1131 = vpack.c.bf16 %v1077, %v1075
        %v1132 = vpack.c.bf16 %v1080, %v1078
        %v1133 = vpack.c.bf16 %v1081, %v1079
        %v1134 = vpack.c.bf16 %v1084, %v1082
        %v1135 = vpack.c.bf16 %v1085, %v1083
        %v1136 = vpack.c.bf16 %v1088, %v1086
        %v1137 = vpack.c.bf16 %v1089, %v1087
        %v1138 = vpack.c.bf16 %v1092, %v1090
        %v1139 = vpack.c.bf16 %v1093, %v1091
        %v1140 = vpack.c.bf16 %v1096, %v1094
        %v1141 = vpack.c.bf16 %v1097, %v1095
        %v1142 = vpack.c.bf16 %v1100, %v1098
        %v1143 = vpack.c.bf16 %v1101, %v1099
        %v1144 = vpack.c.bf16 %v1104, %v1102
        %v1145 = vpack.c.bf16 %v1105, %v1103
        %v1146 = vpack.c.bf16 %v1108, %v1106
        %v1147 = vpack.c.bf16 %v1109, %v1107
        %v1148 = vpack.c.bf16 %v1112, %v1110
        %v1149 = vpack.c.bf16 %v1113, %v1111
        %v1150 = vpack.c.bf16 %v1116, %v1114
        %v1151 = vpack.c.bf16 %v1117, %v1115
        %v1152 = vpack.c.bf16 %v1120, %v1118
        %v1153 = vpack.c.bf16 %v1121, %v1119
        %1154 = vxpose.xlu0.c.b16.start [1/8] %v1138, 128
        %1155 = vxpose.xlu0.c.b16.cont [2/8] %v1140, 128
        %1156 = vxpose.xlu0.c.b16.cont [3/8] %v1142, 128
        %1157 = vxpose.xlu0.c.b16.cont [4/8] %v1144, 128
        %1158 = vxpose.xlu0.c.b16.cont [5/8] %v1146, 128
        %1159 = vxpose.xlu0.c.b16.cont [6/8] %v1148, 128
        %1160 = vxpose.xlu0.c.b16.cont [7/8] %v1150, 128
        %1161 = vxpose.xlu0.c.b16.end [8/8] %v1152, 128
        %v1162 = vpop.trf.xlu0
        %v1163 = vpop.trf.xlu0
        %v1164 = vpop.trf.xlu0
        %v1165 = vpop.trf.xlu0
        %v1166 = vpop.trf.xlu0
        %v1167 = vpop.trf.xlu0
        %v1168 = vpop.trf.xlu0
        %v1169 = vpop.trf.xlu0
        %1170 = vxpose.xlu0.c.b16.start [1/8] %v1139, 128
        %1171 = vxpose.xlu0.c.b16.cont [2/8] %v1141, 128
        %1172 = vxpose.xlu0.c.b16.cont [3/8] %v1143, 128
        %1173 = vxpose.xlu0.c.b16.cont [4/8] %v1145, 128
        %1174 = vxpose.xlu0.c.b16.cont [5/8] %v1147, 128
        %1175 = vxpose.xlu0.c.b16.cont [6/8] %v1149, 128
        %1176 = vxpose.xlu0.c.b16.cont [7/8] %v1151, 128
        %1177 = vxpose.xlu0.c.b16.end [8/8] %v1153, 128
        %v1178 = vpop.trf.xlu0
        %v1179 = vpop.trf.xlu0
        %v1180 = vpop.trf.xlu0
        %v1181 = vpop.trf.xlu0
        %v1182 = vpop.trf.xlu0
        %v1183 = vpop.trf.xlu0
        %v1184 = vpop.trf.xlu0
        %v1185 = vpop.trf.xlu0
        %1186 = vmatprep.subr.bf16.mxu0 %v1123
        %1187 = vmatpush1.bf16.msra.mxu0 %v1122
        %1188 = vmatprep.subr.bf16.mxu0 %v1125
        %1189 = vmatpush1.bf16.msra.mxu0 %v1124
        %1190 = vmatprep.subr.bf16.mxu0 %v1127
        %1191 = vmatpush1.bf16.msra.mxu0 %v1126
        %1192 = vmatprep.subr.bf16.mxu0 %v1129
        %1193 = vmatpush1.bf16.msra.mxu0 %v1128
        %1194 = vmatprep.subr.bf16.mxu0 %v1131
        %1195 = vmatpush1.bf16.msra.mxu0 %v1130
        %1196 = vmatprep.subr.bf16.mxu0 %v1133
        %1197 = vmatpush1.bf16.msra.mxu0 %v1132
        %1198 = vmatprep.subr.bf16.mxu0 %v1135
        %1199 = vmatpush1.bf16.msra.mxu0 %v1134
        %1200 = vmatprep.subr.bf16.mxu0 %v1137
        %1201 = vmatpush1.bf16.msra.mxu0 %v1136
        %1202 = vmatprep.subr.bf16.mxu0 0
        %1203 = vmatpush1.bf16.msra.mxu0 0
        %1204 = vmatprep.subr.bf16.mxu0 0
        %1205 = vmatpush1.bf16.msra.mxu0 0
        %1206 = vmatprep.subr.bf16.mxu0 0
        %1207 = vmatpush1.bf16.msra.mxu0 0
        %1208 = vmatprep.subr.bf16.mxu0 0
        %1209 = vmatpush1.bf16.msra.mxu0 0
        %1210 = vmatprep.subr.bf16.mxu0 0
        %1211 = vmatpush1.bf16.msra.mxu0 0
        %1212 = vmatprep.subr.bf16.mxu0 0
        %1213 = vmatpush1.bf16.msra.mxu0 0
        %1214 = vmatprep.subr.bf16.mxu0 0
        %1215 = vmatpush1.bf16.msra.mxu0 0
        %1216 = vmatprep.subr.bf16.mxu0 0
        %1217 = vmatpush1.bf16.msra.mxu0 0
        %1218 = vmatprep.mubr.bf16.mxu0 0
        %1219 = vmatmul.mubr.bf16.gmra.mrb[0].mxu0 %v1162
        %v1220 = vpop.f32.mrb[0].mxu0
        %v1221 = vadd.f32 0.0, %v1220
        %v1222 = vpop.f32.mrb[0].mxu0
        %v1223 = vadd.f32 0.0, %v1222
        %v1224 = vpop.f32.mrb[0].mxu0
        %v1225 = vadd.f32 0.0, %v1224
        %v1226 = vpop.f32.mrb[0].mxu0
        %v1227 = vadd.f32 0.0, %v1226
        %1228 = vmatprep.mubr.bf16.mxu0 0
        %1229 = vmatmul.mubr.bf16.gmra.mrb[0].mxu0 %v1163
        %v1230 = vpop.f32.mrb[0].mxu0
        %v1231 = vadd.f32 0.0, %v1230
        %v1232 = vpop.f32.mrb[0].mxu0
        %v1233 = vadd.f32 0.0, %v1232
        %v1234 = vpop.f32.mrb[0].mxu0
        %v1235 = vadd.f32 0.0, %v1234
        %v1236 = vpop.f32.mrb[0].mxu0
        %v1237 = vadd.f32 0.0, %v1236
        %1238 = vmatprep.mubr.bf16.mxu0 0
        %1239 = vmatmul.mubr.bf16.gmra.mrb[0].mxu0 %v1164
        %v1240 = vpop.f32.mrb[0].mxu0
        %v1241 = vadd.f32 0.0, %v1240
        %v1242 = vpop.f32.mrb[0].mxu0
        %v1243 = vadd.f32 0.0, %v1242
        %v1244 = vpop.f32.mrb[0].mxu0
        %v1245 = vadd.f32 0.0, %v1244
        %v1246 = vpop.f32.mrb[0].mxu0
        %v1247 = vadd.f32 0.0, %v1246
        %1248 = vmatprep.mubr.bf16.mxu0 0
        %1249 = vmatmul.mubr.bf16.gmra.mrb[0].mxu0 %v1165
        %v1250 = vpop.f32.mrb[0].mxu0
        %v1251 = vadd.f32 0.0, %v1250
        %v1252 = vpop.f32.mrb[0].mxu0
        %v1253 = vadd.f32 0.0, %v1252
        %v1254 = vpop.f32.mrb[0].mxu0
        %v1255 = vadd.f32 0.0, %v1254
        %v1256 = vpop.f32.mrb[0].mxu0
        %v1257 = vadd.f32 0.0, %v1256
        %1258 = vmatprep.mubr.bf16.mxu0 0
        %1259 = vmatmul.mubr.bf16.gmra.mrb[0].mxu0 %v1166
        %v1260 = vpop.f32.mrb[0].mxu0
        %v1261 = vadd.f32 0.0, %v1260
        %v1262 = vpop.f32.mrb[0].mxu0
        %v1263 = vadd.f32 0.0, %v1262
        %v1264 = vpop.f32.mrb[0].mxu0
        %v1265 = vadd.f32 0.0, %v1264
        %v1266 = vpop.f32.mrb[0].mxu0
        %v1267 = vadd.f32 0.0, %v1266
        %1268 = vmatprep.mubr.bf16.mxu0 0
        %1269 = vmatmul.mubr.bf16.gmra.mrb[0].mxu0 %v1167
        %v1270 = vpop.f32.mrb[0].mxu0
        %v1271 = vadd.f32 0.0, %v1270
        %v1272 = vpop.f32.mrb[0].mxu0
        %v1273 = vadd.f32 0.0, %v1272
        %v1274 = vpop.f32.mrb[0].mxu0
        %v1275 = vadd.f32 0.0, %v1274
        %v1276 = vpop.f32.mrb[0].mxu0
        %v1277 = vadd.f32 0.0, %v1276
        %1278 = vmatprep.mubr.bf16.mxu0 0
        %1279 = vmatmul.mubr.bf16.gmra.mrb[0].mxu0 %v1168
        %v1280 = vpop.f32.mrb[0].mxu0
        %v1281 = vadd.f32 0.0, %v1280
        %v1282 = vpop.f32.mrb[0].mxu0
        %v1283 = vadd.f32 0.0, %v1282
        %v1284 = vpop.f32.mrb[0].mxu0
        %v1285 = vadd.f32 0.0, %v1284
        %v1286 = vpop.f32.mrb[0].mxu0
        %v1287 = vadd.f32 0.0, %v1286
        %1288 = vmatprep.mubr.bf16.mxu0 0
        %1289 = vmatmul.mubr.bf16.gmra.mrb[0].mxu0 %v1169
        %v1290 = vpop.f32.mrb[0].mxu0
        %v1291 = vadd.f32 0.0, %v1290
        %v1292 = vpop.f32.mrb[0].mxu0
        %v1293 = vadd.f32 0.0, %v1292
        %v1294 = vpop.f32.mrb[0].mxu0
        %v1295 = vadd.f32 0.0, %v1294
        %v1296 = vpop.f32.mrb[0].mxu0
        %v1297 = vadd.f32 0.0, %v1296
        %1298 = vmatprep.mubr.bf16.mxu0 0
        %1299 = vmatmul.mubr.bf16.gmra.mrb[0].mxu0 %v1178
        %v1300 = vpop.f32.mrb[0].mxu0
        %v1301 = vadd.f32 0.0, %v1300
        %v1302 = vpop.f32.mrb[0].mxu0
        %v1303 = vadd.f32 0.0, %v1302
        %v1304 = vpop.f32.mrb[0].mxu0
        %v1305 = vadd.f32 0.0, %v1304
        %v1306 = vpop.f32.mrb[0].mxu0
        %v1307 = vadd.f32 0.0, %v1306
        %1308 = vmatprep.mubr.bf16.mxu0 0
        %1309 = vmatmul.mubr.bf16.gmra.mrb[0].mxu0 %v1179
        %v1310 = vpop.f32.mrb[0].mxu0
        %v1311 = vadd.f32 0.0, %v1310
        %v1312 = vpop.f32.mrb[0].mxu0
        %v1313 = vadd.f32 0.0, %v1312
        %v1314 = vpop.f32.mrb[0].mxu0
        %v1315 = vadd.f32 0.0, %v1314
        %v1316 = vpop.f32.mrb[0].mxu0
        %v1317 = vadd.f32 0.0, %v1316
        %1318 = vmatprep.mubr.bf16.mxu0 0
        %1319 = vmatmul.mubr.bf16.gmra.mrb[0].mxu0 %v1180
        %v1320 = vpop.f32.mrb[0].mxu0
        %v1321 = vadd.f32 0.0, %v1320
        %v1322 = vpop.f32.mrb[0].mxu0
        %v1323 = vadd.f32 0.0, %v1322
        %v1324 = vpop.f32.mrb[0].mxu0
        %v1325 = vadd.f32 0.0, %v1324
        %v1326 = vpop.f32.mrb[0].mxu0
        %v1327 = vadd.f32 0.0, %v1326
        %1328 = vmatprep.mubr.bf16.mxu0 0
        %1329 = vmatmul.mubr.bf16.gmra.mrb[0].mxu0 %v1181
        %v1330 = vpop.f32.mrb[0].mxu0
        %v1331 = vadd.f32 0.0, %v1330
        %v1332 = vpop.f32.mrb[0].mxu0
        %v1333 = vadd.f32 0.0, %v1332
        %v1334 = vpop.f32.mrb[0].mxu0
        %v1335 = vadd.f32 0.0, %v1334
        %v1336 = vpop.f32.mrb[0].mxu0
        %v1337 = vadd.f32 0.0, %v1336
        %1338 = vmatprep.mubr.bf16.mxu0 0
        %1339 = vmatmul.mubr.bf16.gmra.mrb[0].mxu0 %v1182
        %v1340 = vpop.f32.mrb[0].mxu0
        %v1341 = vadd.f32 0.0, %v1340
        %v1342 = vpop.f32.mrb[0].mxu0
        %v1343 = vadd.f32 0.0, %v1342
        %v1344 = vpop.f32.mrb[0].mxu0
        %v1345 = vadd.f32 0.0, %v1344
        %v1346 = vpop.f32.mrb[0].mxu0
        %v1347 = vadd.f32 0.0, %v1346
        %1348 = vmatprep.mubr.bf16.mxu0 0
        %1349 = vmatmul.mubr.bf16.gmra.mrb[0].mxu0 %v1183
        %v1350 = vpop.f32.mrb[0].mxu0
        %v1351 = vadd.f32 0.0, %v1350
        %v1352 = vpop.f32.mrb[0].mxu0
        %v1353 = vadd.f32 0.0, %v1352
        %v1354 = vpop.f32.mrb[0].mxu0
        %v1355 = vadd.f32 0.0, %v1354
        %v1356 = vpop.f32.mrb[0].mxu0
        %v1357 = vadd.f32 0.0, %v1356
        %1358 = vmatprep.mubr.bf16.mxu0 0
        %1359 = vmatmul.mubr.bf16.gmra.mrb[0].mxu0 %v1184
        %v1360 = vpop.f32.mrb[0].mxu0
        %v1361 = vadd.f32 0.0, %v1360
        %v1362 = vpop.f32.mrb[0].mxu0
        %v1363 = vadd.f32 0.0, %v1362
        %v1364 = vpop.f32.mrb[0].mxu0
        %v1365 = vadd.f32 0.0, %v1364
        %v1366 = vpop.f32.mrb[0].mxu0
        %v1367 = vadd.f32 0.0, %v1366
        %1368 = vmatprep.mubr.bf16.mxu0 0
        %1369 = vmatmul.mubr.bf16.gmra.mrb[0].mxu0 %v1185
        %v1370 = vpop.f32.mrb[0].mxu0
        %v1371 = vadd.f32 0.0, %v1370
        %v1372 = vpop.f32.mrb[0].mxu0
        %v1373 = vadd.f32 0.0, %v1372
        %v1374 = vpop.f32.mrb[0].mxu0
        %v1375 = vadd.f32 0.0, %v1374
        %v1376 = vpop.f32.mrb[0].mxu0
        %v1377 = vadd.f32 0.0, %v1376
        %1378 = vdwg.mxu0
        %v1379 = vmax.f32 %v1221, %v1223
        %1380 = vmax.xlane.f32.xlu0 %v1379
        %v1381 = vpop.xlane.xlu0 %1380
        %v1382 = vmax.f32 %v1225, %v1227
        %1383 = vmax.xlane.f32.xlu0 %v1382
        %v1384 = vpop.xlane.xlu0 %1383
        %v1385 = vmax.f32 %v1231, %v1233
        %1386 = vmax.xlane.f32.xlu0 %v1385
        %v1387 = vpop.xlane.xlu0 %1386
        %v1388 = vmax.f32 %v1235, %v1237
        %1389 = vmax.xlane.f32.xlu0 %v1388
        %v1390 = vpop.xlane.xlu0 %1389
        %v1391 = vmax.f32 %v1241, %v1243
        %1392 = vmax.xlane.f32.xlu0 %v1391
        %v1393 = vpop.xlane.xlu0 %1392
        %v1394 = vmax.f32 %v1245, %v1247
        %1395 = vmax.xlane.f32.xlu0 %v1394
        %v1396 = vpop.xlane.xlu0 %1395
        %v1397 = vmax.f32 %v1251, %v1253
        %1398 = vmax.xlane.f32.xlu0 %v1397
        %v1399 = vpop.xlane.xlu0 %1398
        %v1400 = vmax.f32 %v1255, %v1257
        %1401 = vmax.xlane.f32.xlu0 %v1400
        %v1402 = vpop.xlane.xlu0 %1401
        %v1403 = vmax.f32 %v1261, %v1263
        %1404 = vmax.xlane.f32.xlu0 %v1403
        %v1405 = vpop.xlane.xlu0 %1404
        %v1406 = vmax.f32 %v1265, %v1267
        %1407 = vmax.xlane.f32.xlu0 %v1406
        %v1408 = vpop.xlane.xlu0 %1407
        %v1409 = vmax.f32 %v1271, %v1273
        %1410 = vmax.xlane.f32.xlu0 %v1409
        %v1411 = vpop.xlane.xlu0 %1410
        %v1412 = vmax.f32 %v1275, %v1277
        %1413 = vmax.xlane.f32.xlu0 %v1412
        %v1414 = vpop.xlane.xlu0 %1413
        %v1415 = vmax.f32 %v1281, %v1283
        %1416 = vmax.xlane.f32.xlu0 %v1415
        %v1417 = vpop.xlane.xlu0 %1416
        %v1418 = vmax.f32 %v1285, %v1287
        %1419 = vmax.xlane.f32.xlu0 %v1418
        %v1420 = vpop.xlane.xlu0 %1419
        %v1421 = vmax.f32 %v1291, %v1293
        %1422 = vmax.xlane.f32.xlu0 %v1421
        %v1423 = vpop.xlane.xlu0 %1422
        %v1424 = vmax.f32 %v1295, %v1297
        %1425 = vmax.xlane.f32.xlu0 %v1424
        %v1426 = vpop.xlane.xlu0 %1425
        %v1427 = vmax.f32 %v1301, %v1303
        %1428 = vmax.xlane.f32.xlu0 %v1427
        %v1429 = vpop.xlane.xlu0 %1428
        %v1430 = vmax.f32 %v1305, %v1307
        %1431 = vmax.xlane.f32.xlu0 %v1430
        %v1432 = vpop.xlane.xlu0 %1431
        %v1433 = vmax.f32 %v1311, %v1313
        %1434 = vmax.xlane.f32.xlu0 %v1433
        %v1435 = vpop.xlane.xlu0 %1434
        %v1436 = vmax.f32 %v1315, %v1317
        %1437 = vmax.xlane.f32.xlu0 %v1436
        %v1438 = vpop.xlane.xlu0 %1437
        %v1439 = vmax.f32 %v1321, %v1323
        %1440 = vmax.xlane.f32.xlu0 %v1439
        %v1441 = vpop.xlane.xlu0 %1440
        %v1442 = vmax.f32 %v1325, %v1327
        %1443 = vmax.xlane.f32.xlu0 %v1442
        %v1444 = vpop.xlane.xlu0 %1443
        %v1445 = vmax.f32 %v1331, %v1333
        %1446 = vmax.xlane.f32.xlu0 %v1445
        %v1447 = vpop.xlane.xlu0 %1446
        %v1448 = vmax.f32 %v1335, %v1337
        %1449 = vmax.xlane.f32.xlu0 %v1448
        %v1450 = vpop.xlane.xlu0 %1449
        %v1451 = vmax.f32 %v1341, %v1343
        %1452 = vmax.xlane.f32.xlu0 %v1451
        %v1453 = vpop.xlane.xlu0 %1452
        %v1454 = vmax.f32 %v1345, %v1347
        %1455 = vmax.xlane.f32.xlu0 %v1454
        %v1456 = vpop.xlane.xlu0 %1455
        %v1457 = vmax.f32 %v1351, %v1353
        %1458 = vmax.xlane.f32.xlu0 %v1457
        %v1459 = vpop.xlane.xlu0 %1458
        %v1460 = vmax.f32 %v1355, %v1357
        %1461 = vmax.xlane.f32.xlu0 %v1460
        %v1462 = vpop.xlane.xlu0 %1461
        %v1463 = vmax.f32 %v1361, %v1363
        %1464 = vmax.xlane.f32.xlu0 %v1463
        %v1465 = vpop.xlane.xlu0 %1464
        %v1466 = vmax.f32 %v1365, %v1367
        %1467 = vmax.xlane.f32.xlu0 %v1466
        %v1468 = vpop.xlane.xlu0 %1467
        %v1469 = vmax.f32 %v1371, %v1373
        %1470 = vmax.xlane.f32.xlu0 %v1469
        %v1471 = vpop.xlane.xlu0 %1470
        %v1472 = vmax.f32 %v1375, %v1377
        %1473 = vmax.xlane.f32.xlu0 %v1472
        %v1474 = vpop.xlane.xlu0 %1473
        %v1475 = vsub.f32 %v1221, %v1381
        %v1476 = vsub.f32 %v1223, %v1381
        %v1477 = vsub.f32 %v1225, %v1384
        %v1478 = vsub.f32 %v1227, %v1384
        %v1479 = vsub.f32 %v1231, %v1387
        %v1480 = vsub.f32 %v1233, %v1387
        %v1481 = vsub.f32 %v1235, %v1390
        %v1482 = vsub.f32 %v1237, %v1390
        %v1483 = vsub.f32 %v1241, %v1393
        %v1484 = vsub.f32 %v1243, %v1393
        %v1485 = vsub.f32 %v1245, %v1396
        %v1486 = vsub.f32 %v1247, %v1396
        %v1487 = vsub.f32 %v1251, %v1399
        %v1488 = vsub.f32 %v1253, %v1399
        %v1489 = vsub.f32 %v1255, %v1402
        %v1490 = vsub.f32 %v1257, %v1402
        %v1491 = vsub.f32 %v1261, %v1405
        %v1492 = vsub.f32 %v1263, %v1405
        %v1493 = vsub.f32 %v1265, %v1408
        %v1494 = vsub.f32 %v1267, %v1408
        %v1495 = vsub.f32 %v1271, %v1411
        %v1496 = vsub.f32 %v1273, %v1411
        %v1497 = vsub.f32 %v1275, %v1414
        %v1498 = vsub.f32 %v1277, %v1414
        %v1499 = vsub.f32 %v1281, %v1417
        %v1500 = vsub.f32 %v1283, %v1417
        %v1501 = vsub.f32 %v1285, %v1420
        %v1502 = vsub.f32 %v1287, %v1420
        %v1503 = vsub.f32 %v1291, %v1423
        %v1504 = vsub.f32 %v1293, %v1423
        %v1505 = vsub.f32 %v1295, %v1426
        %v1506 = vsub.f32 %v1297, %v1426
        %v1507 = vsub.f32 %v1301, %v1429
        %v1508 = vsub.f32 %v1303, %v1429
        %v1509 = vsub.f32 %v1305, %v1432
        %v1510 = vsub.f32 %v1307, %v1432
        %v1511 = vsub.f32 %v1311, %v1435
        %v1512 = vsub.f32 %v1313, %v1435
        %v1513 = vsub.f32 %v1315, %v1438
        %v1514 = vsub.f32 %v1317, %v1438
        %v1515 = vsub.f32 %v1321, %v1441
        %v1516 = vsub.f32 %v1323, %v1441
        %v1517 = vsub.f32 %v1325, %v1444
        %v1518 = vsub.f32 %v1327, %v1444
        %v1519 = vsub.f32 %v1331, %v1447
        %v1520 = vsub.f32 %v1333, %v1447
        %v1521 = vsub.f32 %v1335, %v1450
        %v1522 = vsub.f32 %v1337, %v1450
        %v1523 = vsub.f32 %v1341, %v1453
        %v1524 = vsub.f32 %v1343, %v1453
        %v1525 = vsub.f32 %v1345, %v1456
        %v1526 = vsub.f32 %v1347, %v1456
        %v1527 = vsub.f32 %v1351, %v1459
        %v1528 = vsub.f32 %v1353, %v1459
        %v1529 = vsub.f32 %v1355, %v1462
        %v1530 = vsub.f32 %v1357, %v1462
        %v1531 = vsub.f32 %v1361, %v1465
        %v1532 = vsub.f32 %v1363, %v1465
        %v1533 = vsub.f32 %v1365, %v1468
        %v1534 = vsub.f32 %v1367, %v1468
        %v1535 = vsub.f32 %v1371, %v1471
        %v1536 = vsub.f32 %v1373, %v1471
        %v1537 = vsub.f32 %v1375, %v1474
        %v1538 = vsub.f32 %v1377, %v1474
        %v1539 = vmul.f32 %v1475, 1.442695
        %v1540 = vpow.pop %v1539
        %v1541 = vmul.f32 %v1476, 1.442695
        %v1542 = vpow.pop %v1541
        %v1543 = vmul.f32 %v1477, 1.442695
        %v1544 = vpow.pop %v1543
        %v1545 = vmul.f32 %v1478, 1.442695
        %v1546 = vpow.pop %v1545
        %v1547 = vmul.f32 %v1479, 1.442695
        %v1548 = vpow.pop %v1547
        %v1549 = vmul.f32 %v1480, 1.442695
        %v1550 = vpow.pop %v1549
        %v1551 = vmul.f32 %v1481, 1.442695
        %v1552 = vpow.pop %v1551
        %v1553 = vmul.f32 %v1482, 1.442695
        %v1554 = vpow.pop %v1553
        %v1555 = vmul.f32 %v1483, 1.442695
        %v1556 = vpow.pop %v1555
        %v1557 = vmul.f32 %v1484, 1.442695
        %v1558 = vpow.pop %v1557
        %v1559 = vmul.f32 %v1485, 1.442695
        %v1560 = vpow.pop %v1559
        %v1561 = vmul.f32 %v1486, 1.442695
        %v1562 = vpow.pop %v1561
        %v1563 = vmul.f32 %v1487, 1.442695
        %v1564 = vpow.pop %v1563
        %v1565 = vmul.f32 %v1488, 1.442695
        %v1566 = vpow.pop %v1565
        %v1567 = vmul.f32 %v1489, 1.442695
        %v1568 = vpow.pop %v1567
        %v1569 = vmul.f32 %v1490, 1.442695
        %v1570 = vpow.pop %v1569
        %v1571 = vmul.f32 %v1491, 1.442695
        %v1572 = vpow.pop %v1571
        %v1573 = vmul.f32 %v1492, 1.442695
        %v1574 = vpow.pop %v1573
        %v1575 = vmul.f32 %v1493, 1.442695
        %v1576 = vpow.pop %v1575
        %v1577 = vmul.f32 %v1494, 1.442695
        %v1578 = vpow.pop %v1577
        %v1579 = vmul.f32 %v1495, 1.442695
        %v1580 = vpow.pop %v1579
        %v1581 = vmul.f32 %v1496, 1.442695
        %v1582 = vpow.pop %v1581
        %v1583 = vmul.f32 %v1497, 1.442695
        %v1584 = vpow.pop %v1583
        %v1585 = vmul.f32 %v1498, 1.442695
        %v1586 = vpow.pop %v1585
        %v1587 = vmul.f32 %v1499, 1.442695
        %v1588 = vpow.pop %v1587
        %v1589 = vmul.f32 %v1500, 1.442695
        %v1590 = vpow.pop %v1589
        %v1591 = vmul.f32 %v1501, 1.442695
        %v1592 = vpow.pop %v1591
        %v1593 = vmul.f32 %v1502, 1.442695
        %v1594 = vpow.pop %v1593
        %v1595 = vmul.f32 %v1503, 1.442695
        %v1596 = vpow.pop %v1595
        %v1597 = vmul.f32 %v1504, 1.442695
        %v1598 = vpow.pop %v1597
        %v1599 = vmul.f32 %v1505, 1.442695
        %v1600 = vpow.pop %v1599
        %v1601 = vmul.f32 %v1506, 1.442695
        %v1602 = vpow.pop %v1601
        %v1603 = vmul.f32 %v1507, 1.442695
        %v1604 = vpow.pop %v1603
        %v1605 = vmul.f32 %v1508, 1.442695
        %v1606 = vpow.pop %v1605
        %v1607 = vmul.f32 %v1509, 1.442695
        %v1608 = vpow.pop %v1607
        %v1609 = vmul.f32 %v1510, 1.442695
        %v1610 = vpow.pop %v1609
        %v1611 = vmul.f32 %v1511, 1.442695
        %v1612 = vpow.pop %v1611
        %v1613 = vmul.f32 %v1512, 1.442695
        %v1614 = vpow.pop %v1613
        %v1615 = vmul.f32 %v1513, 1.442695
        %v1616 = vpow.pop %v1615
        %v1617 = vmul.f32 %v1514, 1.442695
        %v1618 = vpow.pop %v1617
        %v1619 = vmul.f32 %v1515, 1.442695
        %v1620 = vpow.pop %v1619
        %v1621 = vmul.f32 %v1516, 1.442695
        %v1622 = vpow.pop %v1621
        %v1623 = vmul.f32 %v1517, 1.442695
        %v1624 = vpow.pop %v1623
        %v1625 = vmul.f32 %v1518, 1.442695
        %v1626 = vpow.pop %v1625
        %v1627 = vmul.f32 %v1519, 1.442695
        %v1628 = vpow.pop %v1627
        %v1629 = vmul.f32 %v1520, 1.442695
        %v1630 = vpow.pop %v1629
        %v1631 = vmul.f32 %v1521, 1.442695
        %v1632 = vpow.pop %v1631
        %v1633 = vmul.f32 %v1522, 1.442695
        %v1634 = vpow.pop %v1633
        %v1635 = vmul.f32 %v1523, 1.442695
        %v1636 = vpow.pop %v1635
        %v1637 = vmul.f32 %v1524, 1.442695
        %v1638 = vpow.pop %v1637
        %v1639 = vmul.f32 %v1525, 1.442695
        %v1640 = vpow.pop %v1639
        %v1641 = vmul.f32 %v1526, 1.442695
        %v1642 = vpow.pop %v1641
        %v1643 = vmul.f32 %v1527, 1.442695
        %v1644 = vpow.pop %v1643
        %v1645 = vmul.f32 %v1528, 1.442695
        %v1646 = vpow.pop %v1645
        %v1647 = vmul.f32 %v1529, 1.442695
        %v1648 = vpow.pop %v1647
        %v1649 = vmul.f32 %v1530, 1.442695
        %v1650 = vpow.pop %v1649
        %v1651 = vmul.f32 %v1531, 1.442695
        %v1652 = vpow.pop %v1651
        %v1653 = vmul.f32 %v1532, 1.442695
        %v1654 = vpow.pop %v1653
        %v1655 = vmul.f32 %v1533, 1.442695
        %v1656 = vpow.pop %v1655
        %v1657 = vmul.f32 %v1534, 1.442695
        %v1658 = vpow.pop %v1657
        %v1659 = vmul.f32 %v1535, 1.442695
        %v1660 = vpow.pop %v1659
        %v1661 = vmul.f32 %v1536, 1.442695
        %v1662 = vpow.pop %v1661
        %v1663 = vmul.f32 %v1537, 1.442695
        %v1664 = vpow.pop %v1663
        %v1665 = vmul.f32 %v1538, 1.442695
        %v1666 = vpow.pop %v1665
        %v1667 = vadd.f32 %v1540, %v1542
        %1668 = vadd.xlane.f32.xlu0 %v1667
        %v1669 = vpop.xlane.xlu0 %1668
        %v1670 = vadd.f32 %v1544, %v1546
        %1671 = vadd.xlane.f32.xlu0 %v1670
        %v1672 = vpop.xlane.xlu0 %1671
        %v1673 = vadd.f32 %v1548, %v1550
        %1674 = vadd.xlane.f32.xlu0 %v1673
        %v1675 = vpop.xlane.xlu0 %1674
        %v1676 = vadd.f32 %v1552, %v1554
        %1677 = vadd.xlane.f32.xlu0 %v1676
        %v1678 = vpop.xlane.xlu0 %1677
        %v1679 = vadd.f32 %v1556, %v1558
        %1680 = vadd.xlane.f32.xlu0 %v1679
        %v1681 = vpop.xlane.xlu0 %1680
        %v1682 = vadd.f32 %v1560, %v1562
        %1683 = vadd.xlane.f32.xlu0 %v1682
        %v1684 = vpop.xlane.xlu0 %1683
        %v1685 = vadd.f32 %v1564, %v1566
        %1686 = vadd.xlane.f32.xlu0 %v1685
        %v1687 = vpop.xlane.xlu0 %1686
        %v1688 = vadd.f32 %v1568, %v1570
        %1689 = vadd.xlane.f32.xlu0 %v1688
        %v1690 = vpop.xlane.xlu0 %1689
        %v1691 = vadd.f32 %v1572, %v1574
        %1692 = vadd.xlane.f32.xlu0 %v1691
        %v1693 = vpop.xlane.xlu0 %1692
        %v1694 = vadd.f32 %v1576, %v1578
        %1695 = vadd.xlane.f32.xlu0 %v1694
        %v1696 = vpop.xlane.xlu0 %1695
        %v1697 = vadd.f32 %v1580, %v1582
        %1698 = vadd.xlane.f32.xlu0 %v1697
        %v1699 = vpop.xlane.xlu0 %1698
        %v1700 = vadd.f32 %v1584, %v1586
        %1701 = vadd.xlane.f32.xlu0 %v1700
        %v1702 = vpop.xlane.xlu0 %1701
        %v1703 = vadd.f32 %v1588, %v1590
        %1704 = vadd.xlane.f32.xlu0 %v1703
        %v1705 = vpop.xlane.xlu0 %1704
        %v1706 = vadd.f32 %v1592, %v1594
        %1707 = vadd.xlane.f32.xlu0 %v1706
        %v1708 = vpop.xlane.xlu0 %1707
        %v1709 = vadd.f32 %v1596, %v1598
        %1710 = vadd.xlane.f32.xlu0 %v1709
        %v1711 = vpop.xlane.xlu0 %1710
        %v1712 = vadd.f32 %v1600, %v1602
        %1713 = vadd.xlane.f32.xlu0 %v1712
        %v1714 = vpop.xlane.xlu0 %1713
        %v1715 = vadd.f32 %v1604, %v1606
        %1716 = vadd.xlane.f32.xlu0 %v1715
        %v1717 = vpop.xlane.xlu0 %1716
        %v1718 = vadd.f32 %v1608, %v1610
        %1719 = vadd.xlane.f32.xlu0 %v1718
        %v1720 = vpop.xlane.xlu0 %1719
        %v1721 = vadd.f32 %v1612, %v1614
        %1722 = vadd.xlane.f32.xlu0 %v1721
        %v1723 = vpop.xlane.xlu0 %1722
        %v1724 = vadd.f32 %v1616, %v1618
        %1725 = vadd.xlane.f32.xlu0 %v1724
        %v1726 = vpop.xlane.xlu0 %1725
        %v1727 = vadd.f32 %v1620, %v1622
        %1728 = vadd.xlane.f32.xlu0 %v1727
        %v1729 = vpop.xlane.xlu0 %1728
        %v1730 = vadd.f32 %v1624, %v1626
        %1731 = vadd.xlane.f32.xlu0 %v1730
        %v1732 = vpop.xlane.xlu0 %1731
        %v1733 = vadd.f32 %v1628, %v1630
        %1734 = vadd.xlane.f32.xlu0 %v1733
        %v1735 = vpop.xlane.xlu0 %1734
        %v1736 = vadd.f32 %v1632, %v1634
        %1737 = vadd.xlane.f32.xlu0 %v1736
        %v1738 = vpop.xlane.xlu0 %1737
        %v1739 = vadd.f32 %v1636, %v1638
        %1740 = vadd.xlane.f32.xlu0 %v1739
        %v1741 = vpop.xlane.xlu0 %1740
        %v1742 = vadd.f32 %v1640, %v1642
        %1743 = vadd.xlane.f32.xlu0 %v1742
        %v1744 = vpop.xlane.xlu0 %1743
        %v1745 = vadd.f32 %v1644, %v1646
        %1746 = vadd.xlane.f32.xlu0 %v1745
        %v1747 = vpop.xlane.xlu0 %1746
        %v1748 = vadd.f32 %v1648, %v1650
        %1749 = vadd.xlane.f32.xlu0 %v1748
        %v1750 = vpop.xlane.xlu0 %1749
        %v1751 = vadd.f32 %v1652, %v1654
        %1752 = vadd.xlane.f32.xlu0 %v1751
        %v1753 = vpop.xlane.xlu0 %1752
        %v1754 = vadd.f32 %v1656, %v1658
        %1755 = vadd.xlane.f32.xlu0 %v1754
        %v1756 = vpop.xlane.xlu0 %1755
        %v1757 = vadd.f32 %v1660, %v1662
        %1758 = vadd.xlane.f32.xlu0 %v1757
        %v1759 = vpop.xlane.xlu0 %1758
        %v1760 = vadd.f32 %v1664, %v1666
        %1761 = vadd.xlane.f32.xlu0 %v1760
        %v1762 = vpop.xlane.xlu0 %1761
        %v1763 = vrcp.pop %v1669
        %v1764 = vrcp.pop %v1672
        %v1765 = vrcp.pop %v1675
        %v1766 = vrcp.pop %v1678
        %v1767 = vrcp.pop %v1681
        %v1768 = vrcp.pop %v1684
        %v1769 = vrcp.pop %v1687
        %v1770 = vrcp.pop %v1690
        %v1771 = vrcp.pop %v1693
        %v1772 = vrcp.pop %v1696
        %v1773 = vrcp.pop %v1699
        %v1774 = vrcp.pop %v1702
        %v1775 = vrcp.pop %v1705
        %v1776 = vrcp.pop %v1708
        %v1777 = vrcp.pop %v1711
        %v1778 = vrcp.pop %v1714
        %v1779 = vrcp.pop %v1717
        %v1780 = vrcp.pop %v1720
        %v1781 = vrcp.pop %v1723
        %v1782 = vrcp.pop %v1726
        %v1783 = vrcp.pop %v1729
        %v1784 = vrcp.pop %v1732
        %v1785 = vrcp.pop %v1735
        %v1786 = vrcp.pop %v1738
        %v1787 = vrcp.pop %v1741
        %v1788 = vrcp.pop %v1744
        %v1789 = vrcp.pop %v1747
        %v1790 = vrcp.pop %v1750
        %v1791 = vrcp.pop %v1753
        %v1792 = vrcp.pop %v1756
        %v1793 = vrcp.pop %v1759
        %v1794 = vrcp.pop %v1762
        %v1795 = vmul.f32 %v1540, %v1763
        %v1796 = vmul.f32 %v1542, %v1763
        %v1797 = vmul.f32 %v1544, %v1764
        %v1798 = vmul.f32 %v1546, %v1764
        %v1799 = vmul.f32 %v1548, %v1765
        %v1800 = vmul.f32 %v1550, %v1765
        %v1801 = vmul.f32 %v1552, %v1766
        %v1802 = vmul.f32 %v1554, %v1766
        %v1803 = vmul.f32 %v1556, %v1767
        %v1804 = vmul.f32 %v1558, %v1767
        %v1805 = vmul.f32 %v1560, %v1768
        %v1806 = vmul.f32 %v1562, %v1768
        %v1807 = vmul.f32 %v1564, %v1769
        %v1808 = vmul.f32 %v1566, %v1769
        %v1809 = vmul.f32 %v1568, %v1770
        %v1810 = vmul.f32 %v1570, %v1770
        %v1811 = vmul.f32 %v1572, %v1771
        %v1812 = vmul.f32 %v1574, %v1771
        %v1813 = vmul.f32 %v1576, %v1772
        %v1814 = vmul.f32 %v1578, %v1772
        %v1815 = vmul.f32 %v1580, %v1773
        %v1816 = vmul.f32 %v1582, %v1773
        %v1817 = vmul.f32 %v1584, %v1774
        %v1818 = vmul.f32 %v1586, %v1774
        %v1819 = vmul.f32 %v1588, %v1775
        %v1820 = vmul.f32 %v1590, %v1775
        %v1821 = vmul.f32 %v1592, %v1776
        %v1822 = vmul.f32 %v1594, %v1776
        %v1823 = vmul.f32 %v1596, %v1777
        %v1824 = vmul.f32 %v1598, %v1777
        %v1825 = vmul.f32 %v1600, %v1778
        %v1826 = vmul.f32 %v1602, %v1778
        %v1827 = vmul.f32 %v1604, %v1779
        %v1828 = vmul.f32 %v1606, %v1779
        %v1829 = vmul.f32 %v1608, %v1780
        %v1830 = vmul.f32 %v1610, %v1780
        %v1831 = vmul.f32 %v1612, %v1781
        %v1832 = vmul.f32 %v1614, %v1781
        %v1833 = vmul.f32 %v1616, %v1782
        %v1834 = vmul.f32 %v1618, %v1782
        %v1835 = vmul.f32 %v1620, %v1783
        %v1836 = vmul.f32 %v1622, %v1783
        %v1837 = vmul.f32 %v1624, %v1784
        %v1838 = vmul.f32 %v1626, %v1784
        %v1839 = vmul.f32 %v1628, %v1785
        %v1840 = vmul.f32 %v1630, %v1785
        %v1841 = vmul.f32 %v1632, %v1786
        %v1842 = vmul.f32 %v1634, %v1786
        %v1843 = vmul.f32 %v1636, %v1787
        %v1844 = vmul.f32 %v1638, %v1787
        %v1845 = vmul.f32 %v1640, %v1788
        %v1846 = vmul.f32 %v1642, %v1788
        %v1847 = vmul.f32 %v1644, %v1789
        %v1848 = vmul.f32 %v1646, %v1789
        %v1849 = vmul.f32 %v1648, %v1790
        %v1850 = vmul.f32 %v1650, %v1790
        %v1851 = vmul.f32 %v1652, %v1791
        %v1852 = vmul.f32 %v1654, %v1791
        %v1853 = vmul.f32 %v1656, %v1792
        %v1854 = vmul.f32 %v1658, %v1792
        %v1855 = vmul.f32 %v1660, %v1793
        %v1856 = vmul.f32 %v1662, %v1793
        %v1857 = vmul.f32 %v1664, %v1794
        %v1858 = vmul.f32 %v1666, %v1794
        %1859 = vxpose.xlu0.b32.start [1/16] %v1795, 128
        %1860 = vxpose.xlu0.b32.cont [2/16] %v1797, 128
        %1861 = vxpose.xlu0.b32.cont [3/16] %v1799, 128
        %1862 = vxpose.xlu0.b32.cont [4/16] %v1801, 128
        %1863 = vxpose.xlu0.b32.cont [5/16] %v1803, 128
        %1864 = vxpose.xlu0.b32.cont [6/16] %v1805, 128
        %1865 = vxpose.xlu0.b32.cont [7/16] %v1807, 128
        %1866 = vxpose.xlu0.b32.cont [8/16] %v1809, 128
        %1867 = vxpose.xlu0.b32.cont [9/16] %v1811, 128
        %1868 = vxpose.xlu0.b32.cont [10/16] %v1813, 128
        %1869 = vxpose.xlu0.b32.cont [11/16] %v1815, 128
        %1870 = vxpose.xlu0.b32.cont [12/16] %v1817, 128
        %1871 = vxpose.xlu0.b32.cont [13/16] %v1819, 128
        %1872 = vxpose.xlu0.b32.cont [14/16] %v1821, 128
        %1873 = vxpose.xlu0.b32.cont [15/16] %v1823, 128
        %1874 = vxpose.xlu0.b32.end [16/16] %v1825, 128
        %v1875 = vpop.trf.xlu0
        %v1876 = vpop.trf.xlu0
        %v1877 = vpop.trf.xlu0
        %v1878 = vpop.trf.xlu0
        %v1879 = vpop.trf.xlu0
        %v1880 = vpop.trf.xlu0
        %v1881 = vpop.trf.xlu0
        %v1882 = vpop.trf.xlu0
        %v1883 = vpop.trf.xlu0
        %v1884 = vpop.trf.xlu0
        %v1885 = vpop.trf.xlu0
        %v1886 = vpop.trf.xlu0
        %v1887 = vpop.trf.xlu0
        %v1888 = vpop.trf.xlu0
        %v1889 = vpop.trf.xlu0
        %v1890 = vpop.trf.xlu0
        %1891 = vxpose.xlu0.b32.start [1/16] %v1796, 128
        %1892 = vxpose.xlu0.b32.cont [2/16] %v1798, 128
        %1893 = vxpose.xlu0.b32.cont [3/16] %v1800, 128
        %1894 = vxpose.xlu0.b32.cont [4/16] %v1802, 128
        %1895 = vxpose.xlu0.b32.cont [5/16] %v1804, 128
        %1896 = vxpose.xlu0.b32.cont [6/16] %v1806, 128
        %1897 = vxpose.xlu0.b32.cont [7/16] %v1808, 128
        %1898 = vxpose.xlu0.b32.cont [8/16] %v1810, 128
        %1899 = vxpose.xlu0.b32.cont [9/16] %v1812, 128
        %1900 = vxpose.xlu0.b32.cont [10/16] %v1814, 128
        %1901 = vxpose.xlu0.b32.cont [11/16] %v1816, 128
        %1902 = vxpose.xlu0.b32.cont [12/16] %v1818, 128
        %1903 = vxpose.xlu0.b32.cont [13/16] %v1820, 128
        %1904 = vxpose.xlu0.b32.cont [14/16] %v1822, 128
        %1905 = vxpose.xlu0.b32.cont [15/16] %v1824, 128
        %1906 = vxpose.xlu0.b32.end [16/16] %v1826, 128
        %v1907 = vpop.trf.xlu0
        %v1908 = vpop.trf.xlu0
        %v1909 = vpop.trf.xlu0
        %v1910 = vpop.trf.xlu0
        %v1911 = vpop.trf.xlu0
        %v1912 = vpop.trf.xlu0
        %v1913 = vpop.trf.xlu0
        %v1914 = vpop.trf.xlu0
        %v1915 = vpop.trf.xlu0
        %v1916 = vpop.trf.xlu0
        %v1917 = vpop.trf.xlu0
        %v1918 = vpop.trf.xlu0
        %v1919 = vpop.trf.xlu0
        %v1920 = vpop.trf.xlu0
        %v1921 = vpop.trf.xlu0
        %v1922 = vpop.trf.xlu0
        %1923 = vxpose.xlu0.b32.start [1/16] %v1827, 128
        %1924 = vxpose.xlu0.b32.cont [2/16] %v1829, 128
        %1925 = vxpose.xlu0.b32.cont [3/16] %v1831, 128
        %1926 = vxpose.xlu0.b32.cont [4/16] %v1833, 128
        %1927 = vxpose.xlu0.b32.cont [5/16] %v1835, 128
        %1928 = vxpose.xlu0.b32.cont [6/16] %v1837, 128
        %1929 = vxpose.xlu0.b32.cont [7/16] %v1839, 128
        %1930 = vxpose.xlu0.b32.cont [8/16] %v1841, 128
        %1931 = vxpose.xlu0.b32.cont [9/16] %v1843, 128
        %1932 = vxpose.xlu0.b32.cont [10/16] %v1845, 128
        %1933 = vxpose.xlu0.b32.cont [11/16] %v1847, 128
        %1934 = vxpose.xlu0.b32.cont [12/16] %v1849, 128
        %1935 = vxpose.xlu0.b32.cont [13/16] %v1851, 128
        %1936 = vxpose.xlu0.b32.cont [14/16] %v1853, 128
        %1937 = vxpose.xlu0.b32.cont [15/16] %v1855, 128
        %1938 = vxpose.xlu0.b32.end [16/16] %v1857, 128
        %v1939 = vpop.trf.xlu0
        %v1940 = vpop.trf.xlu0
        %v1941 = vpop.trf.xlu0
        %v1942 = vpop.trf.xlu0
        %v1943 = vpop.trf.xlu0
        %v1944 = vpop.trf.xlu0
        %v1945 = vpop.trf.xlu0
        %v1946 = vpop.trf.xlu0
        %v1947 = vpop.trf.xlu0
        %v1948 = vpop.trf.xlu0
        %v1949 = vpop.trf.xlu0
        %v1950 = vpop.trf.xlu0
        %v1951 = vpop.trf.xlu0
        %v1952 = vpop.trf.xlu0
        %v1953 = vpop.trf.xlu0
        %v1954 = vpop.trf.xlu0
        %1955 = vxpose.xlu0.b32.start [1/16] %v1828, 128
        %1956 = vxpose.xlu0.b32.cont [2/16] %v1830, 128
        %1957 = vxpose.xlu0.b32.cont [3/16] %v1832, 128
        %1958 = vxpose.xlu0.b32.cont [4/16] %v1834, 128
        %1959 = vxpose.xlu0.b32.cont [5/16] %v1836, 128
        %1960 = vxpose.xlu0.b32.cont [6/16] %v1838, 128
        %1961 = vxpose.xlu0.b32.cont [7/16] %v1840, 128
        %1962 = vxpose.xlu0.b32.cont [8/16] %v1842, 128
        %1963 = vxpose.xlu0.b32.cont [9/16] %v1844, 128
        %1964 = vxpose.xlu0.b32.cont [10/16] %v1846, 128
        %1965 = vxpose.xlu0.b32.cont [11/16] %v1848, 128
        %1966 = vxpose.xlu0.b32.cont [12/16] %v1850, 128
        %1967 = vxpose.xlu0.b32.cont [13/16] %v1852, 128
        %1968 = vxpose.xlu0.b32.cont [14/16] %v1854, 128
        %1969 = vxpose.xlu0.b32.cont [15/16] %v1856, 128
        %1970 = vxpose.xlu0.b32.end [16/16] %v1858, 128
        %v1971 = vpop.trf.xlu0
        %v1972 = vpop.trf.xlu0
        %v1973 = vpop.trf.xlu0
        %v1974 = vpop.trf.xlu0
        %v1975 = vpop.trf.xlu0
        %v1976 = vpop.trf.xlu0
        %v1977 = vpop.trf.xlu0
        %v1978 = vpop.trf.xlu0
        %v1979 = vpop.trf.xlu0
        %v1980 = vpop.trf.xlu0
        %v1981 = vpop.trf.xlu0
        %v1982 = vpop.trf.xlu0
        %v1983 = vpop.trf.xlu0
        %v1984 = vpop.trf.xlu0
        %v1985 = vpop.trf.xlu0
        %v1986 = vpop.trf.xlu0
        %v1987 = vpack.c.bf16 %v1876, %v1875
        %v1988 = vpack.c.bf16 %v1940, %v1939
        %v1989 = vpack.c.bf16 %v1878, %v1877
        %v1990 = vpack.c.bf16 %v1942, %v1941
        %v1991 = vpack.c.bf16 %v1880, %v1879
        %v1992 = vpack.c.bf16 %v1944, %v1943
        %v1993 = vpack.c.bf16 %v1882, %v1881
        %v1994 = vpack.c.bf16 %v1946, %v1945
        %v1995 = vpack.c.bf16 %v1884, %v1883
        %v1996 = vpack.c.bf16 %v1948, %v1947
        %v1997 = vpack.c.bf16 %v1886, %v1885
        %v1998 = vpack.c.bf16 %v1950, %v1949
        %v1999 = vpack.c.bf16 %v1888, %v1887
        %v2000 = vpack.c.bf16 %v1952, %v1951
        %v2001 = vpack.c.bf16 %v1890, %v1889
        %v2002 = vpack.c.bf16 %v1954, %v1953
        %v2003 = vpack.c.bf16 %v1908, %v1907
        %v2004 = vpack.c.bf16 %v1972, %v1971
        %v2005 = vpack.c.bf16 %v1910, %v1909
        %v2006 = vpack.c.bf16 %v1974, %v1973
        %v2007 = vpack.c.bf16 %v1912, %v1911
        %v2008 = vpack.c.bf16 %v1976, %v1975
        %v2009 = vpack.c.bf16 %v1914, %v1913
        %v2010 = vpack.c.bf16 %v1978, %v1977
        %v2011 = vpack.c.bf16 %v1916, %v1915
        %v2012 = vpack.c.bf16 %v1980, %v1979
        %v2013 = vpack.c.bf16 %v1918, %v1917
        %v2014 = vpack.c.bf16 %v1982, %v1981
        %v2015 = vpack.c.bf16 %v1920, %v1919
        %v2016 = vpack.c.bf16 %v1984, %v1983
        %v2017 = vpack.c.bf16 %v1922, %v1921
        %v2018 = vpack.c.bf16 %v1986, %v1985
        %v2051 = vunpack.c.l.b16 %v1987
        %v2052 = vunpack.c.l.b16 %v1988
        %v2053 = vunpack.c.h.b16 %v1987
        %v2054 = vunpack.c.h.b16 %v1988
        %v2055 = vunpack.c.l.b16 %v1989
        %v2056 = vunpack.c.l.b16 %v1990
        %v2057 = vunpack.c.h.b16 %v1989
        %v2058 = vunpack.c.h.b16 %v1990
        %v2059 = vunpack.c.l.b16 %v1991
        %v2060 = vunpack.c.l.b16 %v1992
        %v2061 = vunpack.c.h.b16 %v1991
        %v2062 = vunpack.c.h.b16 %v1992
        %v2063 = vunpack.c.l.b16 %v1993
        %v2064 = vunpack.c.l.b16 %v1994
        %v2065 = vunpack.c.h.b16 %v1993
        %v2066 = vunpack.c.h.b16 %v1994
        %v2067 = vunpack.c.l.b16 %v1995
        %v2068 = vunpack.c.l.b16 %v1996
        %v2069 = vunpack.c.h.b16 %v1995
        %v2070 = vunpack.c.h.b16 %v1996
        %v2071 = vunpack.c.l.b16 %v1997
        %v2072 = vunpack.c.l.b16 %v1998
        %v2073 = vunpack.c.h.b16 %v1997
        %v2074 = vunpack.c.h.b16 %v1998
        %v2075 = vunpack.c.l.b16 %v1999
        %v2076 = vunpack.c.l.b16 %v2000
        %v2077 = vunpack.c.h.b16 %v1999
        %v2078 = vunpack.c.h.b16 %v2000
        %v2079 = vunpack.c.l.b16 %v2001
        %v2080 = vunpack.c.l.b16 %v2002
        %v2081 = vunpack.c.h.b16 %v2001
        %v2082 = vunpack.c.h.b16 %v2002
        %v2083 = vunpack.c.l.b16 %v2003
        %v2084 = vunpack.c.l.b16 %v2004
        %v2085 = vunpack.c.h.b16 %v2003
        %v2086 = vunpack.c.h.b16 %v2004
        %v2087 = vunpack.c.l.b16 %v2005
        %v2088 = vunpack.c.l.b16 %v2006
        %v2089 = vunpack.c.h.b16 %v2005
        %v2090 = vunpack.c.h.b16 %v2006
        %v2091 = vunpack.c.l.b16 %v2007
        %v2092 = vunpack.c.l.b16 %v2008
        %v2093 = vunpack.c.h.b16 %v2007
        %v2094 = vunpack.c.h.b16 %v2008
        %v2095 = vunpack.c.l.b16 %v2009
        %v2096 = vunpack.c.l.b16 %v2010
        %v2097 = vunpack.c.h.b16 %v2009
        %v2098 = vunpack.c.h.b16 %v2010
        %v2099 = vunpack.c.l.b16 %v2011
        %v2100 = vunpack.c.l.b16 %v2012
        %v2101 = vunpack.c.h.b16 %v2011
        %v2102 = vunpack.c.h.b16 %v2012
        %v2103 = vunpack.c.l.b16 %v2013
        %v2104 = vunpack.c.l.b16 %v2014
        %v2105 = vunpack.c.h.b16 %v2013
        %v2106 = vunpack.c.h.b16 %v2014
        %v2107 = vunpack.c.l.b16 %v2015
        %v2108 = vunpack.c.l.b16 %v2016
        %v2109 = vunpack.c.h.b16 %v2015
        %v2110 = vunpack.c.h.b16 %v2016
        %v2111 = vunpack.c.l.b16 %v2017
        %v2112 = vunpack.c.l.b16 %v2018
        %v2113 = vunpack.c.h.b16 %v2017
        %v2114 = vunpack.c.h.b16 %v2018
        %v2115 = vpack.c.b16 %v2052, %v2051
        %v2116 = vpack.c.b16 %v2054, %v2053
        %v2117 = vpack.c.b16 %v2056, %v2055
        %v2118 = vpack.c.b16 %v2058, %v2057
        %v2119 = vpack.c.b16 %v2060, %v2059
        %v2120 = vpack.c.b16 %v2062, %v2061
        %v2121 = vpack.c.b16 %v2064, %v2063
        %v2122 = vpack.c.b16 %v2066, %v2065
        %v2123 = vpack.c.b16 %v2068, %v2067
        %v2124 = vpack.c.b16 %v2070, %v2069
        %v2125 = vpack.c.b16 %v2072, %v2071
        %v2126 = vpack.c.b16 %v2074, %v2073
        %v2127 = vpack.c.b16 %v2076, %v2075
        %v2128 = vpack.c.b16 %v2078, %v2077
        %v2129 = vpack.c.b16 %v2080, %v2079
        %v2130 = vpack.c.b16 %v2082, %v2081
        %v2131 = vpack.c.b16 %v2084, %v2083
        %v2132 = vpack.c.b16 %v2086, %v2085
        %v2133 = vpack.c.b16 %v2088, %v2087
        %v2134 = vpack.c.b16 %v2090, %v2089
        %v2135 = vpack.c.b16 %v2092, %v2091
        %v2136 = vpack.c.b16 %v2094, %v2093
        %v2137 = vpack.c.b16 %v2096, %v2095
        %v2138 = vpack.c.b16 %v2098, %v2097
        %v2139 = vpack.c.b16 %v2100, %v2099
        %v2140 = vpack.c.b16 %v2102, %v2101
        %v2141 = vpack.c.b16 %v2104, %v2103
        %v2142 = vpack.c.b16 %v2106, %v2105
        %v2143 = vpack.c.b16 %v2108, %v2107
        %v2144 = vpack.c.b16 %v2110, %v2109
        %v2145 = vpack.c.b16 %v2112, %v2111
        %v2146 = vpack.c.b16 %v2114, %v2113
        %2179 = vst [vmem:[%s255] sm:$0xff] %v2115
        %2180 = vst [vmem:[%s255 + $0x8] sm:$0xff] %v2116
        %2181 = vst [vmem:[%s255 + $0x10] sm:$0xff] %v2117
        %2182 = vst [vmem:[%s255 + $0x18] sm:$0xff] %v2118
        %2183 = vst [vmem:[%s255 + $0x20] sm:$0xff] %v2119
        %2184 = vst [vmem:[%s255 + $0x28] sm:$0xff] %v2120
        %2185 = vst [vmem:[%s255 + $0x30] sm:$0xff] %v2121
        %2186 = vst [vmem:[%s255 + $0x38] sm:$0xff] %v2122
        %2187 = vst [vmem:[%s255 + $0x40] sm:$0xff] %v2123
        %2188 = vst [vmem:[%s255 + $0x48] sm:$0xff] %v2124
        %2189 = vst [vmem:[%s255 + $0x50] sm:$0xff] %v2125
        %2190 = vst [vmem:[%s255 + $0x58] sm:$0xff] %v2126
        %2191 = vst [vmem:[%s255 + $0x60] sm:$0xff] %v2127
        %2192 = vst [vmem:[%s255 + $0x68] sm:$0xff] %v2128
        %2193 = vst [vmem:[%s255 + $0x70] sm:$0xff] %v2129
        %2194 = vst [vmem:[%s255 + $0x78] sm:$0xff] %v2130
        %2195 = vst [vmem:[%s255 + $0x80] sm:$0xff] %v2131
        %2196 = vst [vmem:[%s255 + $0x88] sm:$0xff] %v2132
        %2197 = vst [vmem:[%s255 + $0x90] sm:$0xff] %v2133
        %2198 = vst [vmem:[%s255 + $0x98] sm:$0xff] %v2134
        %2199 = vst [vmem:[%s255 + $0xa0] sm:$0xff] %v2135
        %2200 = vst [vmem:[%s255 + $0xa8] sm:$0xff] %v2136
        %2201 = vst [vmem:[%s255 + $0xb0] sm:$0xff] %v2137
        %2202 = vst [vmem:[%s255 + $0xb8] sm:$0xff] %v2138
        %2203 = vst [vmem:[%s255 + $0xc0] sm:$0xff] %v2139
        %2204 = vst [vmem:[%s255 + $0xc8] sm:$0xff] %v2140
        %2205 = vst [vmem:[%s255 + $0xd0] sm:$0xff] %v2141
        %2206 = vst [vmem:[%s255 + $0xd8] sm:$0xff] %v2142
        %2207 = vst [vmem:[%s255 + $0xe0] sm:$0xff] %v2143
        %2208 = vst [vmem:[%s255 + $0xe8] sm:$0xff] %v2144
        %2209 = vst [vmem:[%s255 + $0xf0] sm:$0xff] %v2145
        %2210 = vst [vmem:[%s255 + $0xf8] sm:$0xff] %v2146
        %v2243 = vunpack.c.l.b16 %v321
        %v2244 = vunpack.c.l.b16 %v322
        %v2245 = vunpack.c.l.b16 %v323
        %v2246 = vunpack.c.l.b16 %v324
        %v2247 = vunpack.c.l.b16 %v325
        %v2248 = vunpack.c.l.b16 %v326
        %v2249 = vunpack.c.l.b16 %v327
        %v2250 = vunpack.c.l.b16 %v328
        %v2251 = vunpack.c.l.b16 %v329
        %v2252 = vunpack.c.l.b16 %v330
        %v2253 = vunpack.c.l.b16 %v331
        %v2254 = vunpack.c.l.b16 %v332
        %v2255 = vunpack.c.l.b16 %v333
        %v2256 = vunpack.c.l.b16 %v334
        %v2257 = vunpack.c.l.b16 %v335
        %v2258 = vunpack.c.l.b16 %v336
        %v2259 = vunpack.c.l.b16 %v337
        %v2260 = vunpack.c.l.b16 %v338
        %v2261 = vunpack.c.l.b16 %v339
        %v2262 = vunpack.c.l.b16 %v340
        %v2263 = vunpack.c.l.b16 %v341
        %v2264 = vunpack.c.l.b16 %v342
        %v2265 = vunpack.c.l.b16 %v343
        %v2266 = vunpack.c.l.b16 %v344
        %v2267 = vunpack.c.l.b16 %v345
        %v2268 = vunpack.c.l.b16 %v346
        %v2269 = vunpack.c.l.b16 %v347
        %v2270 = vunpack.c.l.b16 %v348
        %v2271 = vunpack.c.l.b16 %v349
        %v2272 = vunpack.c.l.b16 %v350
        %v2273 = vunpack.c.l.b16 %v351
        %v2274 = vunpack.c.l.b16 %v352
        %v2275 = vpack.c.b16 %v2244, %v2243
        %v2276 = vpack.c.b16 %v2246, %v2245
        %v2277 = vpack.c.b16 %v2248, %v2247
        %v2278 = vpack.c.b16 %v2250, %v2249
        %v2279 = vpack.c.b16 %v2252, %v2251
        %v2280 = vpack.c.b16 %v2254, %v2253
        %v2281 = vpack.c.b16 %v2256, %v2255
        %v2282 = vpack.c.b16 %v2258, %v2257
        %v2283 = vpack.c.b16 %v2260, %v2259
        %v2284 = vpack.c.b16 %v2262, %v2261
        %v2285 = vpack.c.b16 %v2264, %v2263
        %v2286 = vpack.c.b16 %v2266, %v2265
        %v2287 = vpack.c.b16 %v2268, %v2267
        %v2288 = vpack.c.b16 %v2270, %v2269
        %v2289 = vpack.c.b16 %v2272, %v2271
        %v2290 = vpack.c.b16 %v2274, %v2273
        %2307 = vxpose.xlu0.c.b16.start [1/8] %v2275, 128
        %2308 = vxpose.xlu0.c.b16.cont [2/8] %v2276, 128
        %2309 = vxpose.xlu0.c.b16.cont [3/8] %v2277, 128
        %2310 = vxpose.xlu0.c.b16.cont [4/8] %v2278, 128
        %2311 = vxpose.xlu0.c.b16.cont [5/8] %v2279, 128
        %2312 = vxpose.xlu0.c.b16.cont [6/8] %v2280, 128
        %2313 = vxpose.xlu0.c.b16.cont [7/8] %v2281, 128
        %2314 = vxpose.xlu0.c.b16.end [8/8] %v2282, 128
        %v2315 = vpop.trf.xlu0
        %v2316 = vpop.trf.xlu0
        %v2317 = vpop.trf.xlu0
        %v2318 = vpop.trf.xlu0
        %v2319 = vpop.trf.xlu0
        %v2320 = vpop.trf.xlu0
        %v2321 = vpop.trf.xlu0
        %v2322 = vpop.trf.xlu0
        %2323 = vxpose.xlu0.c.b16.start [1/8] %v2283, 128
        %2324 = vxpose.xlu0.c.b16.cont [2/8] %v2284, 128
        %2325 = vxpose.xlu0.c.b16.cont [3/8] %v2285, 128
        %2326 = vxpose.xlu0.c.b16.cont [4/8] %v2286, 128
        %2327 = vxpose.xlu0.c.b16.cont [5/8] %v2287, 128
        %2328 = vxpose.xlu0.c.b16.cont [6/8] %v2288, 128
        %2329 = vxpose.xlu0.c.b16.cont [7/8] %v2289, 128
        %2330 = vxpose.xlu0.c.b16.end [8/8] %v2290, 128
        %v2331 = vpop.trf.xlu0
        %v2332 = vpop.trf.xlu0
        %v2333 = vpop.trf.xlu0
        %v2334 = vpop.trf.xlu0
        %v2335 = vpop.trf.xlu0
        %v2336 = vpop.trf.xlu0
        %v2337 = vpop.trf.xlu0
        %v2338 = vpop.trf.xlu0
        %2339 = vmatprep.subr.bf16.mxu0 %v674
        %2340 = vmatpush1.bf16.msra.mxu0 %v673
        %2341 = vmatprep.subr.bf16.mxu0 %v676
        %2342 = vmatpush1.bf16.msra.mxu0 %v675
        %2343 = vmatprep.subr.bf16.mxu0 %v678
        %2344 = vmatpush1.bf16.msra.mxu0 %v677
        %2345 = vmatprep.subr.bf16.mxu0 %v680
        %2346 = vmatpush1.bf16.msra.mxu0 %v679
        %2347 = vmatprep.subr.bf16.mxu0 %v682
        %2348 = vmatpush1.bf16.msra.mxu0 %v681
        %2349 = vmatprep.subr.bf16.mxu0 %v684
        %2350 = vmatpush1.bf16.msra.mxu0 %v683
        %2351 = vmatprep.subr.bf16.mxu0 %v686
        %2352 = vmatpush1.bf16.msra.mxu0 %v685
        %2353 = vmatprep.subr.bf16.mxu0 %v688
        %2354 = vmatpush1.bf16.msra.mxu0 %v687
        %2355 = vmatprep.subr.bf16.mxu0 %v690
        %2356 = vmatpush1.bf16.msra.mxu0 %v689
        %2357 = vmatprep.subr.bf16.mxu0 %v692
        %2358 = vmatpush1.bf16.msra.mxu0 %v691
        %2359 = vmatprep.subr.bf16.mxu0 %v694
        %2360 = vmatpush1.bf16.msra.mxu0 %v693
        %2361 = vmatprep.subr.bf16.mxu0 %v696
        %2362 = vmatpush1.bf16.msra.mxu0 %v695
        %2363 = vmatprep.subr.bf16.mxu0 %v698
        %2364 = vmatpush1.bf16.msra.mxu0 %v697
        %2365 = vmatprep.subr.bf16.mxu0 %v700
        %2366 = vmatpush1.bf16.msra.mxu0 %v699
        %2367 = vmatprep.subr.bf16.mxu0 %v702
        %2368 = vmatpush1.bf16.msra.mxu0 %v701
        %2369 = vmatprep.subr.bf16.mxu0 %v704
        %2370 = vmatpush1.bf16.msra.mxu0 %v703
        %2371 = vmatprep.mubr.bf16.mxu0 %v2331
        %2372 = vmatmul.mubr.bf16.gmra.mrb[0].mxu0 %v2315
        %v2373 = vpop.f32.mrb[0].mxu0
        %v2374 = vadd.f32 0.0, %v2373
        %v2375 = vpop.f32.mrb[0].mxu0
        %v2376 = vadd.f32 0.0, %v2375
        %v2377 = vpop.f32.mrb[0].mxu0
        %v2378 = vadd.f32 0.0, %v2377
        %v2379 = vpop.f32.mrb[0].mxu0
        %v2380 = vadd.f32 0.0, %v2379
        %2381 = vmatprep.mubr.bf16.mxu0 %v2332
        %2382 = vmatmul.mubr.bf16.gmra.mrb[0].mxu0 %v2316
        %v2383 = vpop.f32.mrb[0].mxu0
        %v2384 = vadd.f32 0.0, %v2383
        %v2385 = vpop.f32.mrb[0].mxu0
        %v2386 = vadd.f32 0.0, %v2385
        %v2387 = vpop.f32.mrb[0].mxu0
        %v2388 = vadd.f32 0.0, %v2387
        %v2389 = vpop.f32.mrb[0].mxu0
        %v2390 = vadd.f32 0.0, %v2389
        %2391 = vmatprep.mubr.bf16.mxu0 %v2333
        %2392 = vmatmul.mubr.bf16.gmra.mrb[0].mxu0 %v2317
        %v2393 = vpop.f32.mrb[0].mxu0
        %v2394 = vadd.f32 0.0, %v2393
        %v2395 = vpop.f32.mrb[0].mxu0
        %v2396 = vadd.f32 0.0, %v2395
        %v2397 = vpop.f32.mrb[0].mxu0
        %v2398 = vadd.f32 0.0, %v2397
        %v2399 = vpop.f32.mrb[0].mxu0
        %v2400 = vadd.f32 0.0, %v2399
        %2401 = vmatprep.mubr.bf16.mxu0 %v2334
        %2402 = vmatmul.mubr.bf16.gmra.mrb[0].mxu0 %v2318
        %v2403 = vpop.f32.mrb[0].mxu0
        %v2404 = vadd.f32 0.0, %v2403
        %v2405 = vpop.f32.mrb[0].mxu0
        %v2406 = vadd.f32 0.0, %v2405
        %v2407 = vpop.f32.mrb[0].mxu0
        %v2408 = vadd.f32 0.0, %v2407
        %v2409 = vpop.f32.mrb[0].mxu0
        %v2410 = vadd.f32 0.0, %v2409
        %2411 = vmatprep.mubr.bf16.mxu0 %v2335
        %2412 = vmatmul.mubr.bf16.gmra.mrb[0].mxu0 %v2319
        %v2413 = vpop.f32.mrb[0].mxu0
        %v2414 = vadd.f32 0.0, %v2413
        %v2415 = vpop.f32.mrb[0].mxu0
        %v2416 = vadd.f32 0.0, %v2415
        %v2417 = vpop.f32.mrb[0].mxu0
        %v2418 = vadd.f32 0.0, %v2417
        %v2419 = vpop.f32.mrb[0].mxu0
        %v2420 = vadd.f32 0.0, %v2419
        %2421 = vmatprep.mubr.bf16.mxu0 %v2336
        %2422 = vmatmul.mubr.bf16.gmra.mrb[0].mxu0 %v2320
        %v2423 = vpop.f32.mrb[0].mxu0
        %v2424 = vadd.f32 0.0, %v2423
        %v2425 = vpop.f32.mrb[0].mxu0
        %v2426 = vadd.f32 0.0, %v2425
        %v2427 = vpop.f32.mrb[0].mxu0
        %v2428 = vadd.f32 0.0, %v2427
        %v2429 = vpop.f32.mrb[0].mxu0
        %v2430 = vadd.f32 0.0, %v2429
        %2431 = vmatprep.mubr.bf16.mxu0 %v2337
        %2432 = vmatmul.mubr.bf16.gmra.mrb[0].mxu0 %v2321
        %v2433 = vpop.f32.mrb[0].mxu0
        %v2434 = vadd.f32 0.0, %v2433
        %v2435 = vpop.f32.mrb[0].mxu0
        %v2436 = vadd.f32 0.0, %v2435
        %v2437 = vpop.f32.mrb[0].mxu0
        %v2438 = vadd.f32 0.0, %v2437
        %v2439 = vpop.f32.mrb[0].mxu0
        %v2440 = vadd.f32 0.0, %v2439
        %2441 = vmatprep.mubr.bf16.mxu0 %v2338
        %2442 = vmatmul.mubr.bf16.gmra.mrb[0].mxu0 %v2322
        %v2443 = vpop.f32.mrb[0].mxu0
        %v2444 = vadd.f32 0.0, %v2443
        %v2445 = vpop.f32.mrb[0].mxu0
        %v2446 = vadd.f32 0.0, %v2445
        %v2447 = vpop.f32.mrb[0].mxu0
        %v2448 = vadd.f32 0.0, %v2447
        %v2449 = vpop.f32.mrb[0].mxu0
        %v2450 = vadd.f32 0.0, %v2449
        %2451 = vdwg.mxu0
        %v2452 = vpack.c.bf16 %v2378, %v2374
        %v2453 = vpack.c.bf16 %v2380, %v2376
        %v2454 = vpack.c.bf16 %v2388, %v2384
        %v2455 = vpack.c.bf16 %v2390, %v2386
        %v2456 = vpack.c.bf16 %v2398, %v2394
        %v2457 = vpack.c.bf16 %v2400, %v2396
        %v2458 = vpack.c.bf16 %v2408, %v2404
        %v2459 = vpack.c.bf16 %v2410, %v2406
        %v2460 = vpack.c.bf16 %v2418, %v2414
        %v2461 = vpack.c.bf16 %v2420, %v2416
        %v2462 = vpack.c.bf16 %v2428, %v2424
        %v2463 = vpack.c.bf16 %v2430, %v2426
        %v2464 = vpack.c.bf16 %v2438, %v2434
        %v2465 = vpack.c.bf16 %v2440, %v2436
        %v2466 = vpack.c.bf16 %v2448, %v2444
        %v2467 = vpack.c.bf16 %v2450, %v2446
        %v2468 = vpack.c.bf16 %v1797, %v1795
        %v2469 = vpack.c.bf16 %v1798, %v1796
        %v2470 = vpack.c.bf16 %v1801, %v1799
        %v2471 = vpack.c.bf16 %v1802, %v1800
        %v2472 = vpack.c.bf16 %v1805, %v1803
        %v2473 = vpack.c.bf16 %v1806, %v1804
        %v2474 = vpack.c.bf16 %v1809, %v1807
        %v2475 = vpack.c.bf16 %v1810, %v1808
        %v2476 = vpack.c.bf16 %v1813, %v1811
        %v2477 = vpack.c.bf16 %v1814, %v1812
        %v2478 = vpack.c.bf16 %v1817, %v1815
        %v2479 = vpack.c.bf16 %v1818, %v1816
        %v2480 = vpack.c.bf16 %v1821, %v1819
        %v2481 = vpack.c.bf16 %v1822, %v1820
        %v2482 = vpack.c.bf16 %v1825, %v1823
        %v2483 = vpack.c.bf16 %v1826, %v1824
        %v2484 = vpack.c.bf16 %v1829, %v1827
        %v2485 = vpack.c.bf16 %v1830, %v1828
        %v2486 = vpack.c.bf16 %v1833, %v1831
        %v2487 = vpack.c.bf16 %v1834, %v1832
        %v2488 = vpack.c.bf16 %v1837, %v1835
        %v2489 = vpack.c.bf16 %v1838, %v1836
        %v2490 = vpack.c.bf16 %v1841, %v1839
        %v2491 = vpack.c.bf16 %v1842, %v1840
        %v2492 = vpack.c.bf16 %v1845, %v1843
        %v2493 = vpack.c.bf16 %v1846, %v1844
        %v2494 = vpack.c.bf16 %v1849, %v1847
        %v2495 = vpack.c.bf16 %v1850, %v1848
        %v2496 = vpack.c.bf16 %v1853, %v1851
        %v2497 = vpack.c.bf16 %v1854, %v1852
        %v2498 = vpack.c.bf16 %v1857, %v1855
        %v2499 = vpack.c.bf16 %v1858, %v1856
        %2500 = vmatprep.subr.bf16.mxu0 %v2469
        %2501 = vmatpush1.bf16.msra.mxu0 %v2468
        %2502 = vmatprep.subr.bf16.mxu0 %v2471
        %2503 = vmatpush1.bf16.msra.mxu0 %v2470
        %2504 = vmatprep.subr.bf16.mxu0 %v2473
        %2505 = vmatpush1.bf16.msra.mxu0 %v2472
        %2506 = vmatprep.subr.bf16.mxu0 %v2475
        %2507 = vmatpush1.bf16.msra.mxu0 %v2474
        %2508 = vmatprep.subr.bf16.mxu0 %v2477
        %2509 = vmatpush1.bf16.msra.mxu0 %v2476
        %2510 = vmatprep.subr.bf16.mxu0 %v2479
        %2511 = vmatpush1.bf16.msra.mxu0 %v2478
        %2512 = vmatprep.subr.bf16.mxu0 %v2481
        %2513 = vmatpush1.bf16.msra.mxu0 %v2480
        %2514 = vmatprep.subr.bf16.mxu0 %v2483
        %2515 = vmatpush1.bf16.msra.mxu0 %v2482
        %2516 = vmatprep.subr.bf16.mxu0 %v2485
        %2517 = vmatpush1.bf16.msra.mxu0 %v2484
        %2518 = vmatprep.subr.bf16.mxu0 %v2487
        %2519 = vmatpush1.bf16.msra.mxu0 %v2486
        %2520 = vmatprep.subr.bf16.mxu0 %v2489
        %2521 = vmatpush1.bf16.msra.mxu0 %v2488
        %2522 = vmatprep.subr.bf16.mxu0 %v2491
        %2523 = vmatpush1.bf16.msra.mxu0 %v2490
        %2524 = vmatprep.subr.bf16.mxu0 %v2493
        %2525 = vmatpush1.bf16.msra.mxu0 %v2492
        %2526 = vmatprep.subr.bf16.mxu0 %v2495
        %2527 = vmatpush1.bf16.msra.mxu0 %v2494
        %2528 = vmatprep.subr.bf16.mxu0 %v2497
        %2529 = vmatpush1.bf16.msra.mxu0 %v2496
        %2530 = vmatprep.subr.bf16.mxu0 %v2499
        %2531 = vmatpush1.bf16.msra.mxu0 %v2498
        %2532 = vmatprep.mubr.bf16.mxu0 %v2453
        %2533 = vmatmul.mubr.bf16.gmra.mrb[0].mxu0 %v2452
        %v2534 = vpop.f32.mrb[0].mxu0
        %v2535 = vadd.f32 0.0, %v2534
        %v2536 = vpop.f32.mrb[0].mxu0
        %v2537 = vadd.f32 0.0, %v2536
        %v2538 = vpop.f32.mrb[0].mxu0
        %v2539 = vadd.f32 0.0, %v2538
        %v2540 = vpop.f32.mrb[0].mxu0
        %v2541 = vadd.f32 0.0, %v2540
        %2542 = vmatprep.mubr.bf16.mxu0 %v2455
        %2543 = vmatmul.mubr.bf16.gmra.mrb[0].mxu0 %v2454
        %v2544 = vpop.f32.mrb[0].mxu0
        %v2545 = vadd.f32 0.0, %v2544
        %v2546 = vpop.f32.mrb[0].mxu0
        %v2547 = vadd.f32 0.0, %v2546
        %v2548 = vpop.f32.mrb[0].mxu0
        %v2549 = vadd.f32 0.0, %v2548
        %v2550 = vpop.f32.mrb[0].mxu0
        %v2551 = vadd.f32 0.0, %v2550
        %2552 = vmatprep.mubr.bf16.mxu0 %v2457
        %2553 = vmatmul.mubr.bf16.gmra.mrb[0].mxu0 %v2456
        %v2554 = vpop.f32.mrb[0].mxu0
        %v2555 = vadd.f32 0.0, %v2554
        %v2556 = vpop.f32.mrb[0].mxu0
        %v2557 = vadd.f32 0.0, %v2556
        %v2558 = vpop.f32.mrb[0].mxu0
        %v2559 = vadd.f32 0.0, %v2558
        %v2560 = vpop.f32.mrb[0].mxu0
        %v2561 = vadd.f32 0.0, %v2560
        %2562 = vmatprep.mubr.bf16.mxu0 %v2459
        %2563 = vmatmul.mubr.bf16.gmra.mrb[0].mxu0 %v2458
        %v2564 = vpop.f32.mrb[0].mxu0
        %v2565 = vadd.f32 0.0, %v2564
        %v2566 = vpop.f32.mrb[0].mxu0
        %v2567 = vadd.f32 0.0, %v2566
        %v2568 = vpop.f32.mrb[0].mxu0
        %v2569 = vadd.f32 0.0, %v2568
        %v2570 = vpop.f32.mrb[0].mxu0
        %v2571 = vadd.f32 0.0, %v2570
        %2572 = vmatprep.mubr.bf16.mxu0 %v2461
        %2573 = vmatmul.mubr.bf16.gmra.mrb[0].mxu0 %v2460
        %v2574 = vpop.f32.mrb[0].mxu0
        %v2575 = vadd.f32 0.0, %v2574
        %v2576 = vpop.f32.mrb[0].mxu0
        %v2577 = vadd.f32 0.0, %v2576
        %v2578 = vpop.f32.mrb[0].mxu0
        %v2579 = vadd.f32 0.0, %v2578
        %v2580 = vpop.f32.mrb[0].mxu0
        %v2581 = vadd.f32 0.0, %v2580
        %2582 = vmatprep.mubr.bf16.mxu0 %v2463
        %2583 = vmatmul.mubr.bf16.gmra.mrb[0].mxu0 %v2462
        %v2584 = vpop.f32.mrb[0].mxu0
        %v2585 = vadd.f32 0.0, %v2584
        %v2586 = vpop.f32.mrb[0].mxu0
        %v2587 = vadd.f32 0.0, %v2586
        %v2588 = vpop.f32.mrb[0].mxu0
        %v2589 = vadd.f32 0.0, %v2588
        %v2590 = vpop.f32.mrb[0].mxu0
        %v2591 = vadd.f32 0.0, %v2590
        %2592 = vmatprep.mubr.bf16.mxu0 %v2465
        %2593 = vmatmul.mubr.bf16.gmra.mrb[0].mxu0 %v2464
        %v2594 = vpop.f32.mrb[0].mxu0
        %v2595 = vadd.f32 0.0, %v2594
        %v2596 = vpop.f32.mrb[0].mxu0
        %v2597 = vadd.f32 0.0, %v2596
        %v2598 = vpop.f32.mrb[0].mxu0
        %v2599 = vadd.f32 0.0, %v2598
        %v2600 = vpop.f32.mrb[0].mxu0
        %v2601 = vadd.f32 0.0, %v2600
        %2602 = vmatprep.mubr.bf16.mxu0 %v2467
        %2603 = vmatmul.mubr.bf16.gmra.mrb[0].mxu0 %v2466
        %v2604 = vpop.f32.mrb[0].mxu0
        %v2605 = vadd.f32 0.0, %v2604
        %v2606 = vpop.f32.mrb[0].mxu0
        %v2607 = vadd.f32 0.0, %v2606
        %v2608 = vpop.f32.mrb[0].mxu0
        %v2609 = vadd.f32 0.0, %v2608
        %v2610 = vpop.f32.mrb[0].mxu0
        %v2611 = vadd.f32 0.0, %v2610
        %2612 = vdwg.mxu0
        %vm2613 = vcmp.ge.f32.partialorder %v2535, 0.0
        %vm2614 = vcmp.ge.f32.partialorder %v2537, 0.0
        %vm2615 = vcmp.ge.f32.partialorder %v2539, 0.0
        %vm2616 = vcmp.ge.f32.partialorder %v2541, 0.0
        %vm2617 = vcmp.ge.f32.partialorder %v2545, 0.0
        %vm2618 = vcmp.ge.f32.partialorder %v2547, 0.0
        %vm2619 = vcmp.ge.f32.partialorder %v2549, 0.0
        %vm2620 = vcmp.ge.f32.partialorder %v2551, 0.0
        %vm2621 = vcmp.ge.f32.partialorder %v2555, 0.0
        %vm2622 = vcmp.ge.f32.partialorder %v2557, 0.0
        %vm2623 = vcmp.ge.f32.partialorder %v2559, 0.0
        %vm2624 = vcmp.ge.f32.partialorder %v2561, 0.0
        %vm2625 = vcmp.ge.f32.partialorder %v2565, 0.0
        %vm2626 = vcmp.ge.f32.partialorder %v2567, 0.0
        %vm2627 = vcmp.ge.f32.partialorder %v2569, 0.0
        %vm2628 = vcmp.ge.f32.partialorder %v2571, 0.0
        %vm2629 = vcmp.ge.f32.partialorder %v2575, 0.0
        %vm2630 = vcmp.ge.f32.partialorder %v2577, 0.0
        %vm2631 = vcmp.ge.f32.partialorder %v2579, 0.0
        %vm2632 = vcmp.ge.f32.partialorder %v2581, 0.0
        %vm2633 = vcmp.ge.f32.partialorder %v2585, 0.0
        %vm2634 = vcmp.ge.f32.partialorder %v2587, 0.0
        %vm2635 = vcmp.ge.f32.partialorder %v2589, 0.0
        %vm2636 = vcmp.ge.f32.partialorder %v2591, 0.0
        %vm2637 = vcmp.ge.f32.partialorder %v2595, 0.0
        %vm2638 = vcmp.ge.f32.partialorder %v2597, 0.0
        %vm2639 = vcmp.ge.f32.partialorder %v2599, 0.0
        %vm2640 = vcmp.ge.f32.partialorder %v2601, 0.0
        %vm2641 = vcmp.ge.f32.partialorder %v2605, 0.0
        %vm2642 = vcmp.ge.f32.partialorder %v2607, 0.0
        %vm2643 = vcmp.ge.f32.partialorder %v2609, 0.0
        %vm2644 = vcmp.ge.f32.partialorder %v2611, 0.0
        %v2645 = vmul.f32 %v2535, 0.01
        %v2646 = vmul.f32 %v2537, 0.01
        %v2647 = vmul.f32 %v2539, 0.01
        %v2648 = vmul.f32 %v2541, 0.01
        %v2649 = vmul.f32 %v2545, 0.01
        %v2650 = vmul.f32 %v2547, 0.01
        %v2651 = vmul.f32 %v2549, 0.01
        %v2652 = vmul.f32 %v2551, 0.01
        %v2653 = vmul.f32 %v2555, 0.01
        %v2654 = vmul.f32 %v2557, 0.01
        %v2655 = vmul.f32 %v2559, 0.01
        %v2656 = vmul.f32 %v2561, 0.01
        %v2657 = vmul.f32 %v2565, 0.01
        %v2658 = vmul.f32 %v2567, 0.01
        %v2659 = vmul.f32 %v2569, 0.01
        %v2660 = vmul.f32 %v2571, 0.01
        %v2661 = vmul.f32 %v2575, 0.01
        %v2662 = vmul.f32 %v2577, 0.01
        %v2663 = vmul.f32 %v2579, 0.01
        %v2664 = vmul.f32 %v2581, 0.01
        %v2665 = vmul.f32 %v2585, 0.01
        %v2666 = vmul.f32 %v2587, 0.01
        %v2667 = vmul.f32 %v2589, 0.01
        %v2668 = vmul.f32 %v2591, 0.01
        %v2669 = vmul.f32 %v2595, 0.01
        %v2670 = vmul.f32 %v2597, 0.01
        %v2671 = vmul.f32 %v2599, 0.01
        %v2672 = vmul.f32 %v2601, 0.01
        %v2673 = vmul.f32 %v2605, 0.01
        %v2674 = vmul.f32 %v2607, 0.01
        %v2675 = vmul.f32 %v2609, 0.01
        %v2676 = vmul.f32 %v2611, 0.01
        %v2677 = vsel %vm2613, %v2535, %v2645
        %v2678 = vsel %vm2614, %v2537, %v2646
        %v2679 = vsel %vm2615, %v2539, %v2647
        %v2680 = vsel %vm2616, %v2541, %v2648
        %v2681 = vsel %vm2617, %v2545, %v2649
        %v2682 = vsel %vm2618, %v2547, %v2650
        %v2683 = vsel %vm2619, %v2549, %v2651
        %v2684 = vsel %vm2620, %v2551, %v2652
        %v2685 = vsel %vm2621, %v2555, %v2653
        %v2686 = vsel %vm2622, %v2557, %v2654
        %v2687 = vsel %vm2623, %v2559, %v2655
        %v2688 = vsel %vm2624, %v2561, %v2656
        %v2689 = vsel %vm2625, %v2565, %v2657
        %v2690 = vsel %vm2626, %v2567, %v2658
        %v2691 = vsel %vm2627, %v2569, %v2659
        %v2692 = vsel %vm2628, %v2571, %v2660
        %v2693 = vsel %vm2629, %v2575, %v2661
        %v2694 = vsel %vm2630, %v2577, %v2662
        %v2695 = vsel %vm2631, %v2579, %v2663
        %v2696 = vsel %vm2632, %v2581, %v2664
        %v2697 = vsel %vm2633, %v2585, %v2665
        %v2698 = vsel %vm2634, %v2587, %v2666
        %v2699 = vsel %vm2635, %v2589, %v2667
        %v2700 = vsel %vm2636, %v2591, %v2668
        %v2701 = vsel %vm2637, %v2595, %v2669
        %v2702 = vsel %vm2638, %v2597, %v2670
        %v2703 = vsel %vm2639, %v2599, %v2671
        %v2704 = vsel %vm2640, %v2601, %v2672
        %v2705 = vsel %vm2641, %v2605, %v2673
        %v2706 = vsel %vm2642, %v2607, %v2674
        %v2707 = vsel %vm2643, %v2609, %v2675
        %v2708 = vsel %vm2644, %v2611, %v2676
        %2709 = vst [vmem:[%s248] sm:$0xff] %v2677
        %2710 = vst [vmem:[%s248 + $0x8] sm:$0xff] %v2678
        %2711 = vst [vmem:[%s248 + $0x10] sm:$0xff] %v2679
        %2712 = vst [vmem:[%s248 + $0x18] sm:$0xff] %v2680
        %2713 = vst [vmem:[%s248 + $0x20] sm:$0xff] %v2681
        %2714 = vst [vmem:[%s248 + $0x28] sm:$0xff] %v2682
        %2715 = vst [vmem:[%s248 + $0x30] sm:$0xff] %v2683
        %2716 = vst [vmem:[%s248 + $0x38] sm:$0xff] %v2684
        %2717 = vst [vmem:[%s248 + $0x40] sm:$0xff] %v2685
        %2718 = vst [vmem:[%s248 + $0x48] sm:$0xff] %v2686
        %2719 = vst [vmem:[%s248 + $0x50] sm:$0xff] %v2687
        %2720 = vst [vmem:[%s248 + $0x58] sm:$0xff] %v2688
        %2721 = vst [vmem:[%s248 + $0x60] sm:$0xff] %v2689
        %2722 = vst [vmem:[%s248 + $0x68] sm:$0xff] %v2690
        %2723 = vst [vmem:[%s248 + $0x70] sm:$0xff] %v2691
        %2724 = vst [vmem:[%s248 + $0x78] sm:$0xff] %v2692
        %2725 = vst [vmem:[%s248 + $0x80] sm:$0xff] %v2693
        %2726 = vst [vmem:[%s248 + $0x88] sm:$0xff] %v2694
        %2727 = vst [vmem:[%s248 + $0x90] sm:$0xff] %v2695
        %2728 = vst [vmem:[%s248 + $0x98] sm:$0xff] %v2696
        %2729 = vst [vmem:[%s248 + $0xa0] sm:$0xff] %v2697
        %2730 = vst [vmem:[%s248 + $0xa8] sm:$0xff] %v2698
        %2731 = vst [vmem:[%s248 + $0xb0] sm:$0xff] %v2699
        %2732 = vst [vmem:[%s248 + $0xb8] sm:$0xff] %v2700
        %2733 = vst [vmem:[%s248 + $0xc0] sm:$0xff] %v2701
        %2734 = vst [vmem:[%s248 + $0xc8] sm:$0xff] %v2702
        %2735 = vst [vmem:[%s248 + $0xd0] sm:$0xff] %v2703
        %2736 = vst [vmem:[%s248 + $0xd8] sm:$0xff] %v2704
        %2737 = vst [vmem:[%s248 + $0xe0] sm:$0xff] %v2705
        %2738 = vst [vmem:[%s248 + $0xe8] sm:$0xff] %v2706
        %2739 = vst [vmem:[%s248 + $0xf0] sm:$0xff] %v2707
        %2740 = vst [vmem:[%s248 + $0xf8] sm:$0xff] %v2708
        %s2741 = sand.u32 %s102, 1
        %s2742 = scalar_lea.sflag [#allocation4], %s2741
        %s2743 = sand.u32 %s102, 1
        %s2744 = smul.addr %s2743, 256
        %s2745 = scalar_lea.vmem [#allocation8], %s2744
        %s2746 = sand.u32 %s128, 1
        %s2747 = scalar_lea.sflag [#allocation10], %s2746
        %s2748 = sand.u32 %s128, 1
        %s2749 = smul.addr %s2748, 256
        %s2750 = scalar_lea.vmem [#allocation9], %s2749
        // Predicated region
        $region45: #{tpu_custom_call.1} parent=31 // pred_check
          %p2751 = pneg %p112
        $region46: #{tpu_custom_call.1} parent=31 // pred_check_branch
          %2753 = sbr.rel (%p2751) target = $region48
        $region47: #{tpu_custom_call.1} parent=31 // pred_region
          %s2755 = ssub.s32 4096, 4096
          %2756 = vsyncadd %s2742, %s2755
          %s2757 = smul.addr %s26, 32
          %s2758 = smul.addr %s2757, 128
          %s2759 = scalar_lea.hbm %s3, %s2758
          %s2760 = sshll.u32 %s2745, 4
          %s2761 = int_to_ptr.vmem [resolvable:$true] %s2760
          %2766 = dma.vmem_to_hbm [thread:$0]  %s2761, 4096, %s2759, %s2742, 256, 256, 16
        $region48: #{tpu_custom_call.1} parent=31 // pred_fallthru
          _
        // Predicated region
        $region49: #{tpu_custom_call.1} parent=31 // pred_check
          %p2767 = pneg %p138
        $region50: #{tpu_custom_call.1} parent=31 // pred_check_branch
          %2769 = sbr.rel (%p2767) target = $region52
        $region51: #{tpu_custom_call.1} parent=31 // pred_region
          %s2771 = ssub.s32 4096, 4096
          %2772 = vsyncadd %s2747, %s2771
          %s2773 = smul.addr %s26, 64
          %s2774 = smul.addr %s2773, 64
          %s2775 = scalar_lea.hbm %s4, %s2774
          %s2776 = sshll.u32 %s2750, 4
          %s2777 = int_to_ptr.vmem [resolvable:$true] %s2776
          %2782 = dma.vmem_to_hbm [thread:$0]  %s2777, 4096, %s2775, %s2747, 128, 128, 8
        $region52: #{tpu_custom_call.1} parent=31 // pred_fallthru
          _
      $region32: #{tpu_custom_call.1} parent=5 // pred_fallthru
        _
      %p2783 = scmp.le.s32.totalorder 2, %s21
      // Predicated region
      $region53: #{tpu_custom_call.1} parent=5 // pred_check
        %p2784 = pneg %p2783
      $region54: #{tpu_custom_call.1} parent=5 // pred_check_branch
        %2786 = sbr.rel (%p2784) target = $region56
      $region55: #{tpu_custom_call.1} parent=5 // pred_region
        %s2787 = ssub.s32 %s21, 2
        // Predicated region
        $region57: #{tpu_custom_call.1} parent=55 // pred_check
          %p2788 = pneg %p118
        $region58: #{tpu_custom_call.1} parent=55 // pred_check_branch
          %2790 = sbr.rel (%p2788) target = $region60
        $region59: #{tpu_custom_call.1} parent=55 // pred_region
          %s2791 = sand.u32 %s103, 1
          %s2792 = scalar_lea.sflag [#allocation4], %s2791
          %s2793 = sand.u32 %s103, 1
          %s2794 = smul.addr %s2793, 256
          %s2795 = scalar_lea.vmem [#allocation8], %s2794
          %2796 = dma.done %s2792, 4096
        $region60: #{tpu_custom_call.1} parent=55 // pred_fallthru
          _
        // Predicated region
        $region61: #{tpu_custom_call.1} parent=55 // pred_check
          %p2797 = pneg %p144
        $region62: #{tpu_custom_call.1} parent=55 // pred_check_branch
          %2799 = sbr.rel (%p2797) target = $region64
        $region63: #{tpu_custom_call.1} parent=55 // pred_region
          %s2800 = sand.u32 %s129, 1
          %s2801 = scalar_lea.sflag [#allocation10], %s2800
          %s2802 = sand.u32 %s129, 1
          %s2803 = smul.addr %s2802, 256
          %s2804 = scalar_lea.vmem [#allocation9], %s2803
          %2805 = dma.done %s2801, 4096
        $region64: #{tpu_custom_call.1} parent=55 // pred_fallthru
          _
      $region56: #{tpu_custom_call.1} parent=5 // pred_fallthru
        _
    $region6: #{tpu_custom_call.1} parent=1 // loop_footer
      %s25 = sadd.s32 1, %s21
    $region7: #{tpu_custom_call.1} parent=1 // loop_footer_branch
      %20 = sbr.rel target = $region3
    $region8: #{tpu_custom_call.1} parent=1 // loop_exit
      _
    %2806 = vsyncpa [#allocation3], 1
    %s2807 = scalar_lea.sflag [#allocation3], 1
    %2808 = vsyncpa %s2807, 1
    %2809 = vsyncpa [#allocation6], 1
    %2810 = vsyncpa [#allocation4], 1
    %s2811 = scalar_lea.sflag [#allocation4], 1
    %2812 = vsyncpa %s2811, 1
    %2813 = vsyncpa [#allocation10], 1
    %s2814 = scalar_lea.sflag [#allocation10], 1
    %2815 = vsyncpa %s2814, 1

</llo_original>
